<compile_context>
chip_gen: v5e
topology: v5e:2x2
jax: 0.10.0
libtpu: 0.0.40
codegen_flags: <defaults>
</compile_context>

<pallas_src>
import functools

import numpy as np
import jax
import jax.numpy as jnp
from jax import lax
from jax.experimental import pallas as pl
from jax.experimental.pallas import tpu as pltpu


def _round_up(x, m):
    return ((x + m - 1) // m) * m


# --------------------------------------------------------------------------
# Kernel
# --------------------------------------------------------------------------
def bilstm_kernel(emb_ref,            # [T, Bt, E]     time-major embeddings
                  wih_ref,            # [E, 8*Hp]      fwd(4Hp) ‖ bwd(4Hp), gate-padded
                  whh_f_ref,          # [Hp, 4*Hp]
                  whh_b_ref,          # [Hp, 4*Hp]
                  b_ref,              # [1, 8*Hp]      combined biases, gate-padded
                  wout_ref,           # [2*Hp, Opad]
                  bout_ref,           # [1, Opad]
                  out_ref,            # [T, Bt, Opad]
                  gx_scr,             # [T, Bt, 8*Hp]  hoisted x-projection (both dirs)
                  hcat_scr,           # [T, Bt, 2*Hp]  fwd | bwd hidden states
                  hf_scr, cf_scr,     # [Bt, Hp]
                  hb_scr, cb_scr):    # [Bt, Hp]
    T, Bt, E = emb_ref.shape
    Hp = whh_f_ref.shape[0]
    G = 4 * Hp

    # ---- hoisted input projection: one large MXU matmul for both directions ----
    emb2d = emb_ref[...].reshape(T * Bt, E)
    gx = jnp.dot(emb2d, wih_ref[...], preferred_element_type=jnp.float32) + b_ref[...]
    gx_scr[...] = gx.reshape(T, Bt, 2 * G)

    # ---- init recurrent state ----
    hf_scr[...] = jnp.zeros_like(hf_scr)
    cf_scr[...] = jnp.zeros_like(cf_scr)
    hb_scr[...] = jnp.zeros_like(hb_scr)
    cb_scr[...] = jnp.zeros_like(cb_scr)

    whh_f = whh_f_ref[...]
    whh_b = whh_b_ref[...]

    def gates_to_hc(gates, c_prev):
        # Gate columns are lane-aligned 128-wide blocks (PyTorch order i,f,g,o).
        i_g = jax.nn.sigmoid(gates[:, 0 * Hp:1 * Hp])
        f_g = jax.nn.sigmoid(gates[:, 1 * Hp:2 * Hp])
        g_g = jnp.tanh(gates[:, 2 * Hp:3 * Hp])
        o_g = jax.nn.sigmoid(gates[:, 3 * Hp:4 * Hp])
        c_new = f_g * c_prev + i_g * g_g
        h_new = o_g * jnp.tanh(c_new)
        return h_new, c_new

    # ---- single serial loop, both directions interleaved per iteration ----
    def step(i, carry):
        tf = i
        tb = T - 1 - i

        gx_f = gx_scr[tf, :, 0:G]                       # [Bt, 4Hp]
        gx_b = gx_scr[tb, :, G:2 * G]                   # [Bt, 4Hp]

        gates_f = gx_f + jnp.dot(hf_scr[...], whh_f,
                                 preferred_element_type=jnp.float32)
        gates_b = gx_b + jnp.dot(hb_scr[...], whh_b,
                                 preferred_element_type=jnp.float32)

        h_f, c_f = gates_to_hc(gates_f, cf_scr[...])
        h_b, c_b = gates_to_hc(gates_b, cb_scr[...])

        hf_scr[...] = h_f
        cf_scr[...] = c_f
        hb_scr[...] = h_b
        cb_scr[...] = c_b

        hcat_scr[tf, :, 0:Hp] = h_f                     # forward half
        hcat_scr[tb, :, Hp:2 * Hp] = h_b                # backward half
        return carry

    lax.fori_loop(0, T, step, 0)

    # ---- final projection: one lane-dense 2-D matmul ----
    h2d = hcat_scr[...].reshape(T * Bt, 2 * Hp)
    scores = (jnp.dot(h2d, wout_ref[...], preferred_element_type=jnp.float32)
              + bout_ref[...])                           # [T*Bt, Opad]
    out_ref[...] = scores.reshape(T, Bt, out_ref.shape[-1]).astype(out_ref.dtype)


# --------------------------------------------------------------------------
# Parameter preparation (one-time; transpose + lane-align gate padding)
# --------------------------------------------------------------------------
def prepare_bilstm_params(params):
    H = params["w_hh_f"].shape[1]
    O = params["w_out"].shape[0]
    E = params["w_ih_f"].shape[1]
    Hp = _round_up(H, 128)
    Opad = _round_up(O, 128)
    f32 = jnp.float32

    def pad_wih(w_ih):                               # [4H, E] -> [E, 4Hp]
        w_t = w_ih.T.astype(f32)                     # [E, 4H]
        out = jnp.zeros((E, 4 * Hp), f32)
        for g in range(4):
            out = out.at[:, g * Hp:g * Hp + H].set(w_t[:, g * H:(g + 1) * H])
        return out

    def pad_whh(w_hh):                               # [4H, H] -> [Hp, 4Hp]
        w_t = w_hh.T.astype(f32)                     # [H, 4H]
        out = jnp.zeros((Hp, 4 * Hp), f32)
        for g in range(4):
            out = out.at[:H, g * Hp:g * Hp + H].set(w_t[:, g * H:(g + 1) * H])
        return out

    def pad_bias(b):                                 # [4H] -> [1, 4Hp]
        out = jnp.zeros((1, 4 * Hp), f32)
        for g in range(4):
            out = out.at[0, g * Hp:g * Hp + H].set(b[g * H:(g + 1) * H])
        return out

    wih_cat = jnp.concatenate(
        [pad_wih(params["w_ih_f"]), pad_wih(params["w_ih_b"])], axis=1)   # [E, 8Hp]
    b_cat = jnp.concatenate(
        [pad_bias(params["b_ih_f"] + params["b_hh_f"]),
         pad_bias(params["b_ih_b"] + params["b_hh_b"])], axis=1)          # [1, 8Hp]

    w_out_t = params["w_out"].T.astype(f32)                               # [2H, O]
    wout_pad = jnp.zeros((2 * Hp, Opad), f32)
    wout_pad = wout_pad.at[0:H, 0:O].set(w_out_t[0:H])
    wout_pad = wout_pad.at[Hp:Hp + H, 0:O].set(w_out_t[H:2 * H])
    bout_pad = jnp.zeros((1, Opad), f32).at[0, 0:O].set(params["b_out"].astype(f32))

    return dict(
        emb=params["emb"].astype(f32),
        wih_cat=wih_cat,
        whh_f=pad_whh(params["w_hh_f"]),
        whh_b=pad_whh(params["w_hh_b"]),
        b_cat=b_cat,
        wout=wout_pad,
        bout=bout_pad,
        H=H, Hp=Hp, O=O, Opad=Opad, E=E,
    )


def _pick_batch_tile(B, T, E, Hp, Opad, budget_bytes=40 << 20):
    """Largest batch tile (multiple of 8 dividing B, or B itself if B<=8)
    whose per-block VMEM footprint stays under budget (v7x-safe)."""
    def block_bytes(bt):
        f32 = 4
        dbl = 2 * (T * bt * E + T * bt * Opad) * f32           # pipelined blocks
        wts = (E * 8 * Hp + 2 * Hp * 4 * Hp + 8 * Hp
               + 2 * Hp * Opad + Opad) * f32 * 2
        scr = (T * bt * 8 * Hp + T * bt * 2 * Hp + 4 * bt * Hp) * f32
        return dbl + wts + scr

    if B <= 8:
        return B, block_bytes(B)
    candidates = [bt for bt in range(8, B + 1, 8) if B % bt == 0]
    best = 8 if B % 8 == 0 else B
    for bt in candidates:
        if block_bytes(bt) <= budget_bytes:
            best = bt
    return best, block_bytes(best)


# --------------------------------------------------------------------------
# Forward wrapper
# --------------------------------------------------------------------------
def bilstm_forward(x_ids, prep):
    B, T = x_ids.shape
    E, H, Hp, O, Opad = prep["E"], prep["H"], prep["Hp"], prep["O"], prep["Opad"]

    # Embedding gather directly into time-major layout: [T, B, E].
    emb_t = jnp.take(prep["emb"], x_ids.T, axis=0)

    Bt, est_bytes = _pick_batch_tile(B, T, E, Hp, Opad)
    nb = B // Bt

    args = (emb_t, prep["wih_cat"], prep["whh_f"], prep["whh_b"],
            prep["b_cat"], prep["wout"], prep["bout"])

    def full_spec(a):
        n = a.ndim
        return pl.BlockSpec(a.shape, lambda b, n=n: (0,) * n)

    in_specs = [
        pl.BlockSpec((T, Bt, E), lambda b: (0, b, 0)),   # emb: tiled over batch
        full_spec(prep["wih_cat"]),
        full_spec(prep["whh_f"]),
        full_spec(prep["whh_b"]),
        full_spec(prep["b_cat"]),
        full_spec(prep["wout"]),
        full_spec(prep["bout"]),
    ]
    out_spec = pl.BlockSpec((T, Bt, Opad), lambda b: (0, b, 0))

    vmem_limit = int(min(100 << 20, max(32 << 20, est_bytes * 1.25)))

    out_tbo = pl.pallas_call(
        bilstm_kernel,
        out_shape=jax.ShapeDtypeStruct((T, B, Opad), jnp.float32),
        grid_spec=pltpu.PrefetchScalarGridSpec(
            num_scalar_prefetch=0,
            grid=(nb,),
            in_specs=in_specs,
            out_specs=out_spec,
            scratch_shapes=[
                pltpu.VMEM((T, Bt, 8 * Hp), jnp.float32),   # hoisted x-gates (both dirs)
                pltpu.VMEM((T, Bt, 2 * Hp), jnp.float32),   # concat hidden states
                pltpu.VMEM((Bt, Hp), jnp.float32),          # h forward
                pltpu.VMEM((Bt, Hp), jnp.float32),          # c forward
                pltpu.VMEM((Bt, Hp), jnp.float32),          # h backward
                pltpu.VMEM((Bt, Hp), jnp.float32),          # c backward
            ],
        ),
        compiler_params=pltpu.CompilerParams(
            dimension_semantics=("parallel",),              # batch axis: megacore
            vmem_limit_bytes=vmem_limit,
        ),
    )(*args)

    # Back to batch-first [B, T, O], dropping lane padding.
    return jnp.transpose(out_tbo[:, :, :O], (1, 0, 2))


# --------------------------------------------------------------------------
# Pure-JAX reference (torch.nn.LSTM(bidirectional=True) semantics)
# --------------------------------------------------------------------------
def bilstm_reference(x_ids, params):
    emb = jnp.take(params["emb"], x_ids, axis=0)                 # [B, T, E]
    B, T, _ = emb.shape
    H = params["w_hh_f"].shape[1]

    def run(w_ih, w_hh, b_ih, b_hh, xs, reverse):
        def step(carry, x_t):
            h, c = carry
            gates = x_t @ w_ih.T + h @ w_hh.T + b_ih + b_hh
            i = jax.nn.sigmoid(gates[:, :H])
            f = jax.nn.sigmoid(gates[:, H:2 * H])
            g = jnp.tanh(gates[:, 2 * H:3 * H])
            o = jax.nn.sigmoid(gates[:, 3 * H:])
            c = f * c + i * g
            h = o * jnp.tanh(c)
            return (h, c), h

        h0 = jnp.zeros((B, H), jnp.float32)
        xs_t = jnp.transpose(xs, (1, 0, 2))
        if reverse:
            xs_t = xs_t[::-1]
        _, hs = lax.scan(step, (h0, h0), xs_t)
        if reverse:
            hs = hs[::-1]
        return jnp.transpose(hs, (1, 0, 2))

    hf = run(params["w_ih_f"], params["w_hh_f"], params["b_ih_f"],
             params["b_hh_f"], emb, False)
    hb = run(params["w_ih_b"], params["w_hh_b"], params["b_ih_b"],
             params["b_hh_b"], emb, True)
    h = jnp.concatenate([hf, hb], axis=-1)
    return h @ params["w_out"].T + params["b_out"]


if __name__ == "__main__":
    # Small, module-consistent shapes.
    V, E, H, O = 50, 16, 32, 8        # vocab, emb_size, hidden_size, out_size
    B, T = 2, 8                        # batch, sequence length

    key = jax.random.PRNGKey(0)
    k_ids, k_params = jax.random.split(key)
    ks = jax.random.split(k_params, 11)
    s = float(1.0 / np.sqrt(H))
    u = functools.partial(jax.random.uniform, minval=-s, maxval=s, dtype=jnp.float32)

    params = {
        "emb":    jax.random.normal(ks[0], (V, E), jnp.float32),
        "w_ih_f": u(ks[1], (4 * H, E)),
        "w_hh_f": u(ks[2], (4 * H, H)),
        "b_ih_f": u(ks[3], (4 * H,)),
        "b_hh_f": u(ks[4], (4 * H,)),
        "w_ih_b": u(ks[5], (4 * H, E)),
        "w_hh_b": u(ks[6], (4 * H, H)),
        "b_ih_b": u(ks[7], (4 * H,)),
        "b_hh_b": u(ks[8], (4 * H,)),
        "w_out":  u(ks[9], (O, 2 * H)),
        "b_out":  u(ks[10], (O,)),
    }

    x_ids = jax.random.randint(k_ids, (B, T), 0, V, dtype=jnp.int32)

    prep = prepare_bilstm_params(params)      # one-time transpose + gate padding
    out = bilstm_forward(x_ids, prep)
    jax.block_until_ready(out)

    ref = bilstm_reference(x_ids, params)
    np.testing.assert_allclose(np.asarray(out), np.asarray(ref), rtol=1e-4, atol=1e-4)

    print("KERNEL_OK")
</pallas_src>

<mosaic_0001>
module attributes {stable_mosaic.version = 11 : i64} {
  func.func @bilstm_kernel(%arg0: i32, %arg1: memref<8x2x16xf32, #tpu.memory_space<vmem>>, %arg2: memref<16x1024xf32, #tpu.memory_space<vmem>>, %arg3: memref<128x512xf32, #tpu.memory_space<vmem>>, %arg4: memref<128x512xf32, #tpu.memory_space<vmem>>, %arg5: memref<1x1024xf32, #tpu.memory_space<vmem>>, %arg6: memref<256x128xf32, #tpu.memory_space<vmem>>, %arg7: memref<1x128xf32, #tpu.memory_space<vmem>>, %arg8: memref<8x2x128xf32, #tpu.memory_space<vmem>>, %arg9: memref<8x2x1024xf32, #tpu.memory_space<vmem>>, %arg10: memref<8x2x256xf32, #tpu.memory_space<vmem>>, %arg11: memref<2x128xf32, #tpu.memory_space<vmem>>, %arg12: memref<2x128xf32, #tpu.memory_space<vmem>>, %arg13: memref<2x128xf32, #tpu.memory_space<vmem>>, %arg14: memref<2x128xf32, #tpu.memory_space<vmem>>) attributes {dimension_semantics = [#tpu.dimension_semantics<parallel>], iteration_bounds = array<i64: 1>, scalar_prefetch = 0 : i64, scratch_operands = 6 : i64, tpu.core_type = #tpu.core_type<tc>, window_params = [{transform_indices = @transform_0, window_bounds = array<i64: 8, 2, 16>}, {pipeline_mode = #tpu.pipeline_mode<synchronous>, transform_indices = @transform_1, window_bounds = array<i64: 16, 1024>}, {pipeline_mode = #tpu.pipeline_mode<synchronous>, transform_indices = @transform_2, window_bounds = array<i64: 128, 512>}, {pipeline_mode = #tpu.pipeline_mode<synchronous>, transform_indices = @transform_3, window_bounds = array<i64: 128, 512>}, {pipeline_mode = #tpu.pipeline_mode<synchronous>, transform_indices = @transform_4, window_bounds = array<i64: 1, 1024>}, {pipeline_mode = #tpu.pipeline_mode<synchronous>, transform_indices = @transform_5, window_bounds = array<i64: 256, 128>}, {pipeline_mode = #tpu.pipeline_mode<synchronous>, transform_indices = @transform_6, window_bounds = array<i64: 1, 128>}, {transform_indices = @transform_7, window_bounds = array<i64: 8, 2, 128>}]} {
    %c0 = arith.constant 0 : index
    %c0_0 = arith.constant 0 : index
    %c0_1 = arith.constant 0 : index
    %0 = vector.load %arg1[%c0, %c0_0, %c0_1] : memref<8x2x16xf32, #tpu.memory_space<vmem>>, vector<8x2x16xf32>
    %1 = vector.shape_cast %0 : vector<8x2x16xf32> to vector<16x16xf32>
    %c0_2 = arith.constant 0 : index
    %c0_3 = arith.constant 0 : index
    %2 = vector.load %arg2[%c0_2, %c0_3] : memref<16x1024xf32, #tpu.memory_space<vmem>>, vector<16x1024xf32>
    %cst = arith.constant dense<0.000000e+00> : vector<16x1024xf32>
    %3 = tpu.matmul %1, %2, %cst {dimension_numbers = #tpu.dot_dimension_numbers<[1], [0], [0], [1], [0, 0, 1, 1], [], []>} : vector<16x16xf32>, vector<16x1024xf32>, vector<16x1024xf32> -> vector<16x1024xf32>
    %c0_4 = arith.constant 0 : index
    %c0_5 = arith.constant 0 : index
    %4 = vector.load %arg5[%c0_4, %c0_5] : memref<1x1024xf32, #tpu.memory_space<vmem>>, vector<1x1024xf32>
    %5 = vector.broadcast %4 : vector<1x1024xf32> to vector<16x1024xf32>
    %6 = arith.addf %3, %5 : vector<16x1024xf32>
    %7 = vector.shape_cast %6 : vector<16x1024xf32> to vector<8x2x1024xf32>
    %c0_6 = arith.constant 0 : index
    %c0_7 = arith.constant 0 : index
    %c0_8 = arith.constant 0 : index
    %8 = vector.load %arg9[%c0_6, %c0_7, %c0_8] : memref<8x2x1024xf32, #tpu.memory_space<vmem>>, vector<8x2x1024xf32>
    tpu.vector_store %arg9[%c0_6, %c0_7, %c0_8], %7 {strides = array<i32>} : memref<8x2x1024xf32, #tpu.memory_space<vmem>>, vector<8x2x1024xf32>,
    %cst_9 = arith.constant 0.000000e+00 : f32
    %9 = vector.broadcast %cst_9 : f32 to vector<2x128xf32>
    %c0_10 = arith.constant 0 : index
    %c0_11 = arith.constant 0 : index
    %10 = vector.load %arg11[%c0_10, %c0_11] : memref<2x128xf32, #tpu.memory_space<vmem>>, vector<2x128xf32>
    tpu.vector_store %arg11[%c0_10, %c0_11], %9 {strides = array<i32>} : memref<2x128xf32, #tpu.memory_space<vmem>>, vector<2x128xf32>,
    %cst_12 = arith.constant 0.000000e+00 : f32
    %11 = vector.broadcast %cst_12 : f32 to vector<2x128xf32>
    %c0_13 = arith.constant 0 : index
    %c0_14 = arith.constant 0 : index
    %12 = vector.load %arg12[%c0_13, %c0_14] : memref<2x128xf32, #tpu.memory_space<vmem>>, vector<2x128xf32>
    tpu.vector_store %arg12[%c0_13, %c0_14], %11 {strides = array<i32>} : memref<2x128xf32, #tpu.memory_space<vmem>>, vector<2x128xf32>,
    %cst_15 = arith.constant 0.000000e+00 : f32
    %13 = vector.broadcast %cst_15 : f32 to vector<2x128xf32>
    %c0_16 = arith.constant 0 : index
    %c0_17 = arith.constant 0 : index
    %14 = vector.load %arg13[%c0_16, %c0_17] : memref<2x128xf32, #tpu.memory_space<vmem>>, vector<2x128xf32>
    tpu.vector_store %arg13[%c0_16, %c0_17], %13 {strides = array<i32>} : memref<2x128xf32, #tpu.memory_space<vmem>>, vector<2x128xf32>,
    %cst_18 = arith.constant 0.000000e+00 : f32
    %15 = vector.broadcast %cst_18 : f32 to vector<2x128xf32>
    %c0_19 = arith.constant 0 : index
    %c0_20 = arith.constant 0 : index
    %16 = vector.load %arg14[%c0_19, %c0_20] : memref<2x128xf32, #tpu.memory_space<vmem>>, vector<2x128xf32>
    tpu.vector_store %arg14[%c0_19, %c0_20], %15 {strides = array<i32>} : memref<2x128xf32, #tpu.memory_space<vmem>>, vector<2x128xf32>,
    %c0_21 = arith.constant 0 : index
    %c0_22 = arith.constant 0 : index
    %17 = vector.load %arg3[%c0_21, %c0_22] : memref<128x512xf32, #tpu.memory_space<vmem>>, vector<128x512xf32>
    %c0_23 = arith.constant 0 : index
    %c0_24 = arith.constant 0 : index
    %18 = vector.load %arg4[%c0_23, %c0_24] : memref<128x512xf32, #tpu.memory_space<vmem>>, vector<128x512xf32>
    %c0_i32 = arith.constant 0 : i32
    %c8_i32 = arith.constant 8 : i32
    %19 = arith.addi %c0_i32, %c8_i32 : i32
    %c1_i32 = arith.constant 1 : i32
    scf.for %arg15 = %c0_i32 to %19 step %c1_i32  : i32 {
      %c7_i32 = arith.constant 7 : i32
      %29 = arith.subi %c7_i32, %arg15 : i32
      %30 = arith.index_cast %arg15 : i32 to index
      %c0_37 = arith.constant 0 : index
      %c0_38 = arith.constant 0 : index
      %31 = vector.load %arg9[%30, %c0_37, %c0_38] : memref<8x2x1024xf32, #tpu.memory_space<vmem>>, vector<1x2x512xf32>
      %32 = vector.shape_cast %31 : vector<1x2x512xf32> to vector<2x512xf32>
      %33 = arith.index_cast %29 : i32 to index
      %c0_39 = arith.constant 0 : index
      %c512 = arith.constant 512 : index
      %34 = vector.load %arg9[%33, %c0_39, %c512] : memref<8x2x1024xf32, #tpu.memory_space<vmem>>, vector<1x2x512xf32>
      %35 = vector.shape_cast %34 : vector<1x2x512xf32> to vector<2x512xf32>
      %c0_40 = arith.constant 0 : index
      %c0_41 = arith.constant 0 : index
      %36 = vector.load %arg11[%c0_40, %c0_41] : memref<2x128xf32, #tpu.memory_space<vmem>>, vector<2x128xf32>
      %cst_42 = arith.constant dense<0.000000e+00> : vector<2x512xf32>
      %37 = tpu.matmul %36, %17, %cst_42 {dimension_numbers = #tpu.dot_dimension_numbers<[1], [0], [0], [1], [0, 0, 1, 1], [], []>} : vector<2x128xf32>, vector<128x512xf32>, vector<2x512xf32> -> vector<2x512xf32>
      %38 = arith.addf %32, %37 : vector<2x512xf32>
      %c0_43 = arith.constant 0 : index
      %c0_44 = arith.constant 0 : index
      %39 = vector.load %arg13[%c0_43, %c0_44] : memref<2x128xf32, #tpu.memory_space<vmem>>, vector<2x128xf32>
      %cst_45 = arith.constant dense<0.000000e+00> : vector<2x512xf32>
      %40 = tpu.matmul %39, %18, %cst_45 {dimension_numbers = #tpu.dot_dimension_numbers<[1], [0], [0], [1], [0, 0, 1, 1], [], []>} : vector<2x128xf32>, vector<128x512xf32>, vector<2x512xf32> -> vector<2x512xf32>
      %41 = arith.addf %35, %40 : vector<2x512xf32>
      %c0_46 = arith.constant 0 : index
      %c0_47 = arith.constant 0 : index
      %42 = vector.load %arg12[%c0_46, %c0_47] : memref<2x128xf32, #tpu.memory_space<vmem>>, vector<2x128xf32>
      %43 = vector.extract_strided_slice %38 {offsets = [0, 0], sizes = [2, 128], strides = [1, 1]} : vector<2x512xf32> to vector<2x128xf32>
      %44 = arith.negf %43 : vector<2x128xf32>
      %45 = math.exp %44 : vector<2x128xf32>
      %cst_48 = arith.constant 1.000000e+00 : f32
      %46 = vector.broadcast %cst_48 : f32 to vector<2x128xf32>
      %47 = arith.addf %46, %45 : vector<2x128xf32>
      %48 = arith.divf %46, %47 : vector<2x128xf32>
      %49 = vector.extract_strided_slice %38 {offsets = [0, 128], sizes = [2, 128], strides = [1, 1]} : vector<2x512xf32> to vector<2x128xf32>
      %50 = arith.negf %49 : vector<2x128xf32>
      %51 = math.exp %50 : vector<2x128xf32>
      %cst_49 = arith.constant 1.000000e+00 : f32
      %52 = vector.broadcast %cst_49 : f32 to vector<2x128xf32>
      %53 = arith.addf %52, %51 : vector<2x128xf32>
      %54 = arith.divf %52, %53 : vector<2x128xf32>
      %55 = vector.extract_strided_slice %38 {offsets = [0, 256], sizes = [2, 128], strides = [1, 1]} : vector<2x512xf32> to vector<2x128xf32>
      %56 = math.tanh %55 : vector<2x128xf32>
      %57 = vector.extract_strided_slice %38 {offsets = [0, 384], sizes = [2, 128], strides = [1, 1]} : vector<2x512xf32> to vector<2x128xf32>
      %58 = arith.negf %57 : vector<2x128xf32>
      %59 = math.exp %58 : vector<2x128xf32>
      %cst_50 = arith.constant 1.000000e+00 : f32
      %60 = vector.broadcast %cst_50 : f32 to vector<2x128xf32>
      %61 = arith.addf %60, %59 : vector<2x128xf32>
      %62 = arith.divf %60, %61 : vector<2x128xf32>
      %63 = arith.mulf %54, %42 : vector<2x128xf32>
      %64 = arith.mulf %48, %56 : vector<2x128xf32>
      %65 = arith.addf %63, %64 : vector<2x128xf32>
      %66 = math.tanh %65 : vector<2x128xf32>
      %67 = arith.mulf %62, %66 : vector<2x128xf32>
      %c0_51 = arith.constant 0 : index
      %c0_52 = arith.constant 0 : index
      %68 = vector.load %arg14[%c0_51, %c0_52] : memref<2x128xf32, #tpu.memory_space<vmem>>, vector<2x128xf32>
      %69 = vector.extract_strided_slice %41 {offsets = [0, 0], sizes = [2, 128], strides = [1, 1]} : vector<2x512xf32> to vector<2x128xf32>
      %70 = arith.negf %69 : vector<2x128xf32>
      %71 = math.exp %70 : vector<2x128xf32>
      %cst_53 = arith.constant 1.000000e+00 : f32
      %72 = vector.broadcast %cst_53 : f32 to vector<2x128xf32>
      %73 = arith.addf %72, %71 : vector<2x128xf32>
      %74 = arith.divf %72, %73 : vector<2x128xf32>
      %75 = vector.extract_strided_slice %41 {offsets = [0, 128], sizes = [2, 128], strides = [1, 1]} : vector<2x512xf32> to vector<2x128xf32>
      %76 = arith.negf %75 : vector<2x128xf32>
      %77 = math.exp %76 : vector<2x128xf32>
      %cst_54 = arith.constant 1.000000e+00 : f32
      %78 = vector.broadcast %cst_54 : f32 to vector<2x128xf32>
      %79 = arith.addf %78, %77 : vector<2x128xf32>
      %80 = arith.divf %78, %79 : vector<2x128xf32>
      %81 = vector.extract_strided_slice %41 {offsets = [0, 256], sizes = [2, 128], strides = [1, 1]} : vector<2x512xf32> to vector<2x128xf32>
      %82 = math.tanh %81 : vector<2x128xf32>
      %83 = vector.extract_strided_slice %41 {offsets = [0, 384], sizes = [2, 128], strides = [1, 1]} : vector<2x512xf32> to vector<2x128xf32>
      %84 = arith.negf %83 : vector<2x128xf32>
      %85 = math.exp %84 : vector<2x128xf32>
      %cst_55 = arith.constant 1.000000e+00 : f32
      %86 = vector.broadcast %cst_55 : f32 to vector<2x128xf32>
      %87 = arith.addf %86, %85 : vector<2x128xf32>
      %88 = arith.divf %86, %87 : vector<2x128xf32>
      %89 = arith.mulf %80, %68 : vector<2x128xf32>
      %90 = arith.mulf %74, %82 : vector<2x128xf32>
      %91 = arith.addf %89, %90 : vector<2x128xf32>
      %92 = math.tanh %91 : vector<2x128xf32>
      %93 = arith.mulf %88, %92 : vector<2x128xf32>
      %c0_56 = arith.constant 0 : index
      %c0_57 = arith.constant 0 : index
      %94 = vector.load %arg11[%c0_56, %c0_57] : memref<2x128xf32, #tpu.memory_space<vmem>>, vector<2x128xf32>
      tpu.vector_store %arg11[%c0_56, %c0_57], %67 {strides = array<i32>} : memref<2x128xf32, #tpu.memory_space<vmem>>, vector<2x128xf32>,
      %c0_58 = arith.constant 0 : index
      %c0_59 = arith.constant 0 : index
      %95 = vector.load %arg12[%c0_58, %c0_59] : memref<2x128xf32, #tpu.memory_space<vmem>>, vector<2x128xf32>
      tpu.vector_store %arg12[%c0_58, %c0_59], %65 {strides = array<i32>} : memref<2x128xf32, #tpu.memory_space<vmem>>, vector<2x128xf32>,
      %c0_60 = arith.constant 0 : index
      %c0_61 = arith.constant 0 : index
      %96 = vector.load %arg13[%c0_60, %c0_61] : memref<2x128xf32, #tpu.memory_space<vmem>>, vector<2x128xf32>
      tpu.vector_store %arg13[%c0_60, %c0_61], %93 {strides = array<i32>} : memref<2x128xf32, #tpu.memory_space<vmem>>, vector<2x128xf32>,
      %c0_62 = arith.constant 0 : index
      %c0_63 = arith.constant 0 : index
      %97 = vector.load %arg14[%c0_62, %c0_63] : memref<2x128xf32, #tpu.memory_space<vmem>>, vector<2x128xf32>
      tpu.vector_store %arg14[%c0_62, %c0_63], %91 {strides = array<i32>} : memref<2x128xf32, #tpu.memory_space<vmem>>, vector<2x128xf32>,
      %98 = arith.index_cast %arg15 : i32 to index
      %c0_64 = arith.constant 0 : index
      %c0_65 = arith.constant 0 : index
      %99 = vector.load %arg10[%98, %c0_64, %c0_65] : memref<8x2x256xf32, #tpu.memory_space<vmem>>, vector<1x2x128xf32>
      %100 = vector.shape_cast %99 : vector<1x2x128xf32> to vector<2x128xf32>
      %101 = vector.shape_cast %67 : vector<2x128xf32> to vector<1x2x128xf32>
      tpu.vector_store %arg10[%98, %c0_64, %c0_65], %101 {strides = array<i32>} : memref<8x2x256xf32, #tpu.memory_space<vmem>>, vector<1x2x128xf32>,
      %102 = arith.index_cast %29 : i32 to index
      %c0_66 = arith.constant 0 : index
      %c128 = arith.constant 128 : index
      %103 = vector.load %arg10[%102, %c0_66, %c128] : memref<8x2x256xf32, #tpu.memory_space<vmem>>, vector<1x2x128xf32>
      %104 = vector.shape_cast %103 : vector<1x2x128xf32> to vector<2x128xf32>
      %105 = vector.shape_cast %93 : vector<2x128xf32> to vector<1x2x128xf32>
      tpu.vector_store %arg10[%102, %c0_66, %c128], %105 {strides = array<i32>} : memref<8x2x256xf32, #tpu.memory_space<vmem>>, vector<1x2x128xf32>,
    }
    %c8_i32_25 = arith.constant 8 : i32
    %c0_26 = arith.constant 0 : index
    %c0_27 = arith.constant 0 : index
    %c0_28 = arith.constant 0 : index
    %20 = vector.load %arg10[%c0_26, %c0_27, %c0_28] : memref<8x2x256xf32, #tpu.memory_space<vmem>>, vector<8x2x256xf32>
    %21 = vector.shape_cast %20 : vector<8x2x256xf32> to vector<16x256xf32>
    %c0_29 = arith.constant 0 : index
    %c0_30 = arith.constant 0 : index
    %22 = vector.load %arg6[%c0_29, %c0_30] : memref<256x128xf32, #tpu.memory_space<vmem>>, vector<256x128xf32>
    %cst_31 = arith.constant dense<0.000000e+00> : vector<16x128xf32>
    %23 = tpu.matmul %21, %22, %cst_31 {dimension_numbers = #tpu.dot_dimension_numbers<[1], [0], [0], [1], [0, 0, 1, 1], [], []>} : vector<16x256xf32>, vector<256x128xf32>, vector<16x128xf32> -> vector<16x128xf32>
    %c0_32 = arith.constant 0 : index
    %c0_33 = arith.constant 0 : index
    %24 = vector.load %arg7[%c0_32, %c0_33] : memref<1x128xf32, #tpu.memory_space<vmem>>, vector<1x128xf32>
    %25 = vector.broadcast %24 : vector<1x128xf32> to vector<16x128xf32>
    %26 = arith.addf %23, %25 : vector<16x128xf32>
    %27 = vector.shape_cast %26 : vector<16x128xf32> to vector<8x2x128xf32>
    %c0_34 = arith.constant 0 : index
    %c0_35 = arith.constant 0 : index
    %c0_36 = arith.constant 0 : index
    %28 = vector.load %arg8[%c0_34, %c0_35, %c0_36] : memref<8x2x128xf32, #tpu.memory_space<vmem>>, vector<8x2x128xf32>
    tpu.vector_store %arg8[%c0_34, %c0_35, %c0_36], %27 {strides = array<i32>} : memref<8x2x128xf32, #tpu.memory_space<vmem>>, vector<8x2x128xf32>,
    return
  }
  func.func @transform_0(%arg0: i32) -> (i32, i32, i32) {
    %c0_i32 = arith.constant 0 : i32
    %c0_i32_0 = arith.constant 0 : i32
    %c0_i32_1 = arith.constant 0 : i32
    return %c0_i32, %arg0, %c0_i32_0 : i32, i32, i32
  }
  func.func @transform_1(%arg0: i32) -> (i32, i32) {
    %c0_i32 = arith.constant 0 : i32
    %c0_i32_0 = arith.constant 0 : i32
    %c0_i32_1 = arith.constant 0 : i32
    return %c0_i32, %c0_i32_0 : i32, i32
  }
  func.func @transform_2(%arg0: i32) -> (i32, i32) {
    %c0_i32 = arith.constant 0 : i32
    %c0_i32_0 = arith.constant 0 : i32
    %c0_i32_1 = arith.constant 0 : i32
    return %c0_i32, %c0_i32_0 : i32, i32
  }
  func.func @transform_3(%arg0: i32) -> (i32, i32) {
    %c0_i32 = arith.constant 0 : i32
    %c0_i32_0 = arith.constant 0 : i32
    %c0_i32_1 = arith.constant 0 : i32
    return %c0_i32, %c0_i32_0 : i32, i32
  }
  func.func @transform_4(%arg0: i32) -> (i32, i32) {
    %c0_i32 = arith.constant 0 : i32
    %c0_i32_0 = arith.constant 0 : i32
    %c0_i32_1 = arith.constant 0 : i32
    return %c0_i32, %c0_i32_0 : i32, i32
  }
  func.func @transform_5(%arg0: i32) -> (i32, i32) {
    %c0_i32 = arith.constant 0 : i32
    %c0_i32_0 = arith.constant 0 : i32
    %c0_i32_1 = arith.constant 0 : i32
    return %c0_i32, %c0_i32_0 : i32, i32
  }
  func.func @transform_6(%arg0: i32) -> (i32, i32) {
    %c0_i32 = arith.constant 0 : i32
    %c0_i32_0 = arith.constant 0 : i32
    %c0_i32_1 = arith.constant 0 : i32
    return %c0_i32, %c0_i32_0 : i32, i32
  }
  func.func @transform_7(%arg0: i32) -> (i32, i32, i32) {
    %c0_i32 = arith.constant 0 : i32
    %c0_i32_0 = arith.constant 0 : i32
    %c0_i32_1 = arith.constant 0 : i32
    return %c0_i32, %arg0, %c0_i32_0 : i32, i32, i32
  }
}

</mosaic_0001>

<llo_original>
// kernel: tpu_custom_call.1
$region0: #{tpu_custom_call.1}
  #allocation0 [shape = 'u32[]', space=smem, size = 0x4, offset = 0x4, fixed_abs, tag = 'smem constant byte address 0x4 - core index']
  #allocation1 [shape = 'u32[72,128]{1,0:T(1,128)}', space=vmem, size = 0x9000, scoped, tag = 'internal scratch']
  #allocation2 [shape = 'f32[8,2,1024]{2,1,0:T(2,128)}', space=vmem, size = 0x10000, scoped, tag = 'scratch operand']
  #allocation3 [shape = 'f32[8,2,256]{2,1,0:T(2,128)}', space=vmem, size = 0x4000, scoped, tag = 'scratch operand']
  #allocation4 [shape = 'f32[2,128]{1,0:T(2,128)}', space=vmem, size = 0x400, scoped, tag = 'scratch operand']
  #allocation5 [shape = 'f32[2,128]{1,0:T(2,128)}', space=vmem, size = 0x400, scoped, tag = 'scratch operand']
  #allocation6 [shape = 'f32[2,128]{1,0:T(2,128)}', space=vmem, size = 0x400, scoped, tag = 'scratch operand']
  #allocation7 [shape = 'f32[2,128]{1,0:T(2,128)}', space=vmem, size = 0x400, scoped, tag = 'scratch operand']
  %s0 = inlined_call_operand.hbm [shape: f32[8,2,16], index: 0, kind: input, shape index: {}]
  %s1 = inlined_call_operand.hbm [shape: f32[16,1024], index: 1, kind: input, shape index: {}]
  %s2 = inlined_call_operand.hbm [shape: f32[128,512], index: 2, kind: input, shape index: {}]
  %s3 = inlined_call_operand.hbm [shape: f32[128,512], index: 3, kind: input, shape index: {}]
  %s4 = inlined_call_operand.hbm [shape: f32[1,1024], index: 4, kind: input, shape index: {}]
  %s5 = inlined_call_operand.hbm [shape: f32[256,128], index: 5, kind: input, shape index: {}]
  %s6 = inlined_call_operand.vmem [shape: f32[1,128], index: 6, kind: input, shape index: {}]
  %s7 = inlined_call_operand.hbm [shape: f32[8,2,128], index: 7, kind: output, shape index: {}]
  %s8 = sld [smem:[#allocation0]]
  $region69: #{tpu_custom_call.1} parent=0
    _
  %s10 = ssub.s32 1, %s8
  %s11 = scalar_select 0, %s10, %s8
  $region1: #{tpu_custom_call.1} parent=0
    #allocation8 [shape = 'u8[8192]{0}', space=vmem, size = 0x2000, scoped, tag = 'input window, operand 0, single buffered']
    #allocation9 [shape = 's32[1]{0}', space=sflag, size = 0x4, scoped, tag = 'scoped memory for tpu_custom_call.1']
    #allocation10 [shape = 's32[1]{0}', space=sflag, size = 0x4, scoped, tag = 'scoped memory for tpu_custom_call.1']
    #allocation11 [shape = 'u8[65536]{0}', space=vmem, size = 0x10000, scoped, tag = 'input window, operand 1, single buffered']
    #allocation12 [shape = 's32[1]{0}', space=sflag, size = 0x4, scoped, tag = 'scoped memory for tpu_custom_call.1']
    #allocation13 [shape = 'u8[262144]{0}', space=vmem, size = 0x40000, scoped, tag = 'input window, operand 2, single buffered']
    #allocation14 [shape = 'u8[262144]{0}', space=vmem, size = 0x40000, scoped, tag = 'input window, operand 3, single buffered']
    #allocation15 [shape = 's32[1]{0}', space=sflag, size = 0x4, scoped, tag = 'scoped memory for tpu_custom_call.1']
    #allocation16 [shape = 'u8[4096]{0}', space=vmem, size = 0x1000, scoped, tag = 'input window, operand 4, single buffered']
    #allocation17 [shape = 'u8[131072]{0}', space=vmem, size = 0x20000, scoped, tag = 'input window, operand 5, single buffered']
    #allocation18 [shape = 's32[1]{0}', space=sflag, size = 0x4, scoped, tag = 'scoped memory for tpu_custom_call.1']
    #allocation19 [shape = 'u8[8192]{0}', space=vmem, size = 0x2000, scoped, tag = 'output window, operand 0, single buffered']
    %12 = vsyncpa [#allocation9], 0
    %13 = vsyncpa [#allocation12], 0
    %14 = vsyncpa [#allocation15], 0
    %15 = vsyncpa [#allocation18], 0
    %16 = vsyncpa [#allocation10], 0
    // Predicated region
    $region2: #{tpu_custom_call.1} parent=1 // pred_check
      _
    $region3: #{tpu_custom_call.1} parent=1 // pred_check_branch
      %18 = sbr.rel (0) target = $region5
    $region4: #{tpu_custom_call.1} parent=1 // pred_region
      %20 = vsyncadd [#allocation9], 0
      %s21 = sshll.u32 %s0, 4
      %s22 = int_to_ptr.hbm [resolvable:$true] %s21
      %s23 = sshll.u32 [#allocation8], 4
      %s24 = int_to_ptr.vmem [resolvable:$true] %s23
      %29 = dma.hbm_to_vmem [thread:$0]  %s22, 256, %s24, [#allocation9], 32, 32, 2
    $region5: #{tpu_custom_call.1} parent=1 // pred_fallthru
      _
    // Predicated region
    $region6: #{tpu_custom_call.1} parent=1 // pred_check
      _
    $region7: #{tpu_custom_call.1} parent=1 // pred_check_branch
      %31 = sbr.rel (0) target = $region9
    $region8: #{tpu_custom_call.1} parent=1 // pred_region
      %33 = vsyncadd [#allocation12], 0
      %s34 = sshll.u32 %s1, 4
      %s35 = int_to_ptr.hbm [resolvable:$true] %s34
      %s36 = sshll.u32 [#allocation11], 4
      %s37 = int_to_ptr.vmem [resolvable:$true] %s36
      %42 = dma.hbm_to_vmem [thread:$0]  %s35, 2048, %s37, [#allocation12], 1024, 1024, 64
    $region9: #{tpu_custom_call.1} parent=1 // pred_fallthru
      _
    // Predicated region
    $region10: #{tpu_custom_call.1} parent=1 // pred_check
      _
    $region11: #{tpu_custom_call.1} parent=1 // pred_check_branch
      %44 = sbr.rel (0) target = $region13
    $region12: #{tpu_custom_call.1} parent=1 // pred_region
      %46 = vsyncadd [#allocation12], 0
      %s47 = sshll.u32 %s2, 4
      %s48 = int_to_ptr.hbm [resolvable:$true] %s47
      %s49 = sshll.u32 [#allocation13], 4
      %s50 = int_to_ptr.vmem [resolvable:$true] %s49
      %55 = dma.hbm_to_vmem [thread:$0]  %s48, 8192, %s50, [#allocation12], 512, 512, 32
    $region13: #{tpu_custom_call.1} parent=1 // pred_fallthru
      _
    // Predicated region
    $region14: #{tpu_custom_call.1} parent=1 // pred_check
      _
    $region15: #{tpu_custom_call.1} parent=1 // pred_check_branch
      %57 = sbr.rel (0) target = $region17
    $region16: #{tpu_custom_call.1} parent=1 // pred_region
      %59 = vsyncadd [#allocation15], 0
      %s60 = sshll.u32 %s3, 4
      %s61 = int_to_ptr.hbm [resolvable:$true] %s60
      %s62 = sshll.u32 [#allocation14], 4
      %s63 = int_to_ptr.vmem [resolvable:$true] %s62
      %68 = dma.hbm_to_vmem [thread:$0]  %s61, 8192, %s63, [#allocation15], 512, 512, 32
    $region17: #{tpu_custom_call.1} parent=1 // pred_fallthru
      _
    // Predicated region
    $region18: #{tpu_custom_call.1} parent=1 // pred_check
      _
    $region19: #{tpu_custom_call.1} parent=1 // pred_check_branch
      %70 = sbr.rel (0) target = $region21
    $region20: #{tpu_custom_call.1} parent=1 // pred_region
      %72 = vsyncadd [#allocation15], 0
      %s74 = sshll.u32 %s4, 4
      %s75 = int_to_ptr.hbm [resolvable:$true] %s74
      %s76 = sshll.u32 [#allocation16], 4
      %s77 = int_to_ptr.vmem [resolvable:$true] %s76
      %79 = dma.hbm_to_vmem [thread:$0]  %s75, 128, %s77, [#allocation15]
    $region21: #{tpu_custom_call.1} parent=1 // pred_fallthru
      _
    // Predicated region
    $region22: #{tpu_custom_call.1} parent=1 // pred_check
      _
    $region23: #{tpu_custom_call.1} parent=1 // pred_check_branch
      %81 = sbr.rel (0) target = $region25
    $region24: #{tpu_custom_call.1} parent=1 // pred_region
      %83 = vsyncadd [#allocation18], 0
      %s84 = sshll.u32 %s5, 4
      %s85 = int_to_ptr.hbm [resolvable:$true] %s84
      %s86 = sshll.u32 [#allocation17], 4
      %s87 = int_to_ptr.vmem [resolvable:$true] %s86
      %92 = dma.hbm_to_vmem [thread:$0]  %s85, 4096, %s87, [#allocation18], 128, 128, 8
    $region25: #{tpu_custom_call.1} parent=1 // pred_fallthru
      _
    // Predicated region
    $region26: #{tpu_custom_call.1} parent=1 // pred_check
      _
    $region27: #{tpu_custom_call.1} parent=1 // pred_check_branch
      %94 = sbr.rel (0) target = $region29
    $region28: #{tpu_custom_call.1} parent=1 // pred_region
      _
    $region29: #{tpu_custom_call.1} parent=1 // pred_fallthru
      _
    // Predicated region
    $region30: #{tpu_custom_call.1} parent=1 // pred_check
      _
    $region31: #{tpu_custom_call.1} parent=1 // pred_check_branch
      %96 = sbr.rel (0) target = $region33
    $region32: #{tpu_custom_call.1} parent=1 // pred_region
      %98 = dma.done [#allocation9], 256
    $region33: #{tpu_custom_call.1} parent=1 // pred_fallthru
      _
    // Predicated region
    $region34: #{tpu_custom_call.1} parent=1 // pred_check
      _
    $region35: #{tpu_custom_call.1} parent=1 // pred_check_branch
      %100 = sbr.rel (0) target = $region37
    $region36: #{tpu_custom_call.1} parent=1 // pred_region
      %102 = dma.done [#allocation12], 2048
    $region37: #{tpu_custom_call.1} parent=1 // pred_fallthru
      _
    // Predicated region
    $region38: #{tpu_custom_call.1} parent=1 // pred_check
      _
    $region39: #{tpu_custom_call.1} parent=1 // pred_check_branch
      %104 = sbr.rel (0) target = $region41
    $region40: #{tpu_custom_call.1} parent=1 // pred_region
      %106 = dma.done [#allocation12], 8192
    $region41: #{tpu_custom_call.1} parent=1 // pred_fallthru
      _
    // Predicated region
    $region42: #{tpu_custom_call.1} parent=1 // pred_check
      _
    $region43: #{tpu_custom_call.1} parent=1 // pred_check_branch
      %108 = sbr.rel (0) target = $region45
    $region44: #{tpu_custom_call.1} parent=1 // pred_region
      %110 = dma.done [#allocation15], 8192
    $region45: #{tpu_custom_call.1} parent=1 // pred_fallthru
      _
    // Predicated region
    $region46: #{tpu_custom_call.1} parent=1 // pred_check
      _
    $region47: #{tpu_custom_call.1} parent=1 // pred_check_branch
      %112 = sbr.rel (0) target = $region49
    $region48: #{tpu_custom_call.1} parent=1 // pred_region
      %114 = dma.done [#allocation15], 128
    $region49: #{tpu_custom_call.1} parent=1 // pred_fallthru
      _
    // Predicated region
    $region50: #{tpu_custom_call.1} parent=1 // pred_check
      _
    $region51: #{tpu_custom_call.1} parent=1 // pred_check_branch
      %116 = sbr.rel (0) target = $region53
    $region52: #{tpu_custom_call.1} parent=1 // pred_region
      %118 = dma.done [#allocation18], 4096
    $region53: #{tpu_custom_call.1} parent=1 // pred_fallthru
      _
    %v119 = vld [vmem:[#allocation8] sm:$0x3]
    %v120 = vld [vmem:[#allocation8 + $0x2] sm:$0x3]
    %v121 = vld [vmem:[#allocation8 + $0x4] sm:$0x3]
    %v122 = vld [vmem:[#allocation8 + $0x6] sm:$0x3]
    %v123 = vld [vmem:[#allocation8 + $0x8] sm:$0x3]
    %v124 = vld [vmem:[#allocation8 + $0xa] sm:$0x3]
    %v125 = vld [vmem:[#allocation8 + $0xc] sm:$0x3]
    %v126 = vld [vmem:[#allocation8 + $0xe] sm:$0x3]
    %v127 = vld [vmem:[#allocation11] sm:$0xff]
    %v128 = vld [vmem:[#allocation11 + $0x8] sm:$0xff]
    %v129 = vld [vmem:[#allocation11 + $0x10] sm:$0xff]
    %v130 = vld [vmem:[#allocation11 + $0x18] sm:$0xff]
    %v131 = vld [vmem:[#allocation11 + $0x20] sm:$0xff]
    %v132 = vld [vmem:[#allocation11 + $0x28] sm:$0xff]
    %v133 = vld [vmem:[#allocation11 + $0x30] sm:$0xff]
    %v134 = vld [vmem:[#allocation11 + $0x38] sm:$0xff]
    %v135 = vld [vmem:[#allocation11 + $0x40] sm:$0xff]
    %v136 = vld [vmem:[#allocation11 + $0x48] sm:$0xff]
    %v137 = vld [vmem:[#allocation11 + $0x50] sm:$0xff]
    %v138 = vld [vmem:[#allocation11 + $0x58] sm:$0xff]
    %v139 = vld [vmem:[#allocation11 + $0x60] sm:$0xff]
    %v140 = vld [vmem:[#allocation11 + $0x68] sm:$0xff]
    %v141 = vld [vmem:[#allocation11 + $0x70] sm:$0xff]
    %v142 = vld [vmem:[#allocation11 + $0x78] sm:$0xff]
    %v143 = vld [vmem:[#allocation16] sm:$0xff]
    %v145 = vperm.slane %v143, 0
    %v146 = vperm.slane %v143, 1
    %v147 = vperm.slane %v143, 2
    %v148 = vperm.slane %v143, 3
    %v149 = vperm.slane %v143, 4
    %v150 = vperm.slane %v143, 5
    %v151 = vperm.slane %v143, 6
    %v152 = vperm.slane %v143, 7
    %169 = vst [vmem:[#allocation1] ss:$4 sm:$0xff] %v119
    %s170 = scalar_lea.vmem [#allocation1], 1
    %171 = vst [vmem:[%s170] ss:$4 sm:$0xff] %v120
    %s172 = scalar_lea.vmem [#allocation1], 2
    %173 = vst [vmem:[%s172] ss:$4 sm:$0xff] %v121
    %s174 = scalar_lea.vmem [#allocation1], 3
    %175 = vst [vmem:[%s174] ss:$4 sm:$0xff] %v122
    %s176 = scalar_lea.vmem [#allocation1], 32
    %177 = vst [vmem:[%s176] ss:$4 sm:$0xff] %v123
    %s178 = scalar_lea.vmem [#allocation1], 33
    %179 = vst [vmem:[%s178] ss:$4 sm:$0xff] %v124
    %s180 = scalar_lea.vmem [#allocation1], 34
    %181 = vst [vmem:[%s180] ss:$4 sm:$0xff] %v125
    %s182 = scalar_lea.vmem [#allocation1], 35
    %183 = vst [vmem:[%s182] ss:$4 sm:$0xff] %v126
    %v184 = vld.sshfl [vmem:[#allocation1] sm:$0xff pattern:$0x73625140]
    %v185 = vld.sshfl [vmem:[#allocation1 + $0x20] sm:$0xff pattern:$0x73625140]
    %vm186 = vcmask 130048
    %v187 = vsel %vm186, %v184, 0
    %v189 = vsel %vm186, %v185, 0
    %191 = vmatpush.msra.mxu0 0.0
    %192 = vmatpush.msra.mxu0 0.0
    %193 = vmatpush.msra.mxu0 0.0
    %194 = vmatpush.msra.mxu0 0.0
    %195 = vmatpush.msra.mxu0 0.0
    %196 = vmatpush.msra.mxu0 0.0
    %197 = vmatpush.msra.mxu0 0.0
    %198 = vmatpush.msra.mxu0 0.0
    %199 = vmatpush.msra.mxu0 0.0
    %200 = vmatpush.msra.mxu0 0.0
    %201 = vmatpush.msra.mxu0 0.0
    %202 = vmatpush.msra.mxu0 0.0
    %203 = vmatpush.msra.mxu0 0.0
    %204 = vmatpush.msra.mxu0 0.0
    %205 = vmatpush.msra.mxu0 %v135
    %206 = vmatpush.msra.mxu0 %v127
    %207 = vmatmul.f32.gmra.mxu0 %v187
    %v208 = vpop.f32.mrf.mxu0
    %v209 = vadd.f32 %v145, %v208
    %210 = vmatmul.f32.gmra.mxu0 %v189
    %v211 = vpop.f32.mrf.mxu0
    %v212 = vadd.f32 %v145, %v211
    %213 = vdwg.mxu0
    %214 = vmatpush.msra.mxu0 0.0
    %215 = vmatpush.msra.mxu0 0.0
    %216 = vmatpush.msra.mxu0 0.0
    %217 = vmatpush.msra.mxu0 0.0
    %218 = vmatpush.msra.mxu0 0.0
    %219 = vmatpush.msra.mxu0 0.0
    %220 = vmatpush.msra.mxu0 0.0
    %221 = vmatpush.msra.mxu0 0.0
    %222 = vmatpush.msra.mxu0 0.0
    %223 = vmatpush.msra.mxu0 0.0
    %224 = vmatpush.msra.mxu0 0.0
    %225 = vmatpush.msra.mxu0 0.0
    %226 = vmatpush.msra.mxu0 0.0
    %227 = vmatpush.msra.mxu0 0.0
    %228 = vmatpush.msra.mxu0 %v136
    %229 = vmatpush.msra.mxu0 %v128
    %230 = vmatmul.f32.gmra.mxu0 %v187
    %v231 = vpop.f32.mrf.mxu0
    %v232 = vadd.f32 %v146, %v231
    %233 = vmatmul.f32.gmra.mxu0 %v189
    %v234 = vpop.f32.mrf.mxu0
    %v235 = vadd.f32 %v146, %v234
    %236 = vdwg.mxu0
    %237 = vmatpush.msra.mxu0 0.0
    %238 = vmatpush.msra.mxu0 0.0
    %239 = vmatpush.msra.mxu0 0.0
    %240 = vmatpush.msra.mxu0 0.0
    %241 = vmatpush.msra.mxu0 0.0
    %242 = vmatpush.msra.mxu0 0.0
    %243 = vmatpush.msra.mxu0 0.0
    %244 = vmatpush.msra.mxu0 0.0
    %245 = vmatpush.msra.mxu0 0.0
    %246 = vmatpush.msra.mxu0 0.0
    %247 = vmatpush.msra.mxu0 0.0
    %248 = vmatpush.msra.mxu0 0.0
    %249 = vmatpush.msra.mxu0 0.0
    %250 = vmatpush.msra.mxu0 0.0
    %251 = vmatpush.msra.mxu0 %v137
    %252 = vmatpush.msra.mxu0 %v129
    %253 = vmatmul.f32.gmra.mxu0 %v187
    %v254 = vpop.f32.mrf.mxu0
    %v255 = vadd.f32 %v147, %v254
    %256 = vmatmul.f32.gmra.mxu0 %v189
    %v257 = vpop.f32.mrf.mxu0
    %v258 = vadd.f32 %v147, %v257
    %259 = vdwg.mxu0
    %260 = vmatpush.msra.mxu0 0.0
    %261 = vmatpush.msra.mxu0 0.0
    %262 = vmatpush.msra.mxu0 0.0
    %263 = vmatpush.msra.mxu0 0.0
    %264 = vmatpush.msra.mxu0 0.0
    %265 = vmatpush.msra.mxu0 0.0
    %266 = vmatpush.msra.mxu0 0.0
    %267 = vmatpush.msra.mxu0 0.0
    %268 = vmatpush.msra.mxu0 0.0
    %269 = vmatpush.msra.mxu0 0.0
    %270 = vmatpush.msra.mxu0 0.0
    %271 = vmatpush.msra.mxu0 0.0
    %272 = vmatpush.msra.mxu0 0.0
    %273 = vmatpush.msra.mxu0 0.0
    %274 = vmatpush.msra.mxu0 %v138
    %275 = vmatpush.msra.mxu0 %v130
    %276 = vmatmul.f32.gmra.mxu0 %v187
    %v277 = vpop.f32.mrf.mxu0
    %v278 = vadd.f32 %v148, %v277
    %279 = vmatmul.f32.gmra.mxu0 %v189
    %v280 = vpop.f32.mrf.mxu0
    %v281 = vadd.f32 %v148, %v280
    %282 = vdwg.mxu0
    %283 = vmatpush.msra.mxu0 0.0
    %284 = vmatpush.msra.mxu0 0.0
    %285 = vmatpush.msra.mxu0 0.0
    %286 = vmatpush.msra.mxu0 0.0
    %287 = vmatpush.msra.mxu0 0.0
    %288 = vmatpush.msra.mxu0 0.0
    %289 = vmatpush.msra.mxu0 0.0
    %290 = vmatpush.msra.mxu0 0.0
    %291 = vmatpush.msra.mxu0 0.0
    %292 = vmatpush.msra.mxu0 0.0
    %293 = vmatpush.msra.mxu0 0.0
    %294 = vmatpush.msra.mxu0 0.0
    %295 = vmatpush.msra.mxu0 0.0
    %296 = vmatpush.msra.mxu0 0.0
    %297 = vmatpush.msra.mxu0 %v139
    %298 = vmatpush.msra.mxu0 %v131
    %299 = vmatmul.f32.gmra.mxu0 %v187
    %v300 = vpop.f32.mrf.mxu0
    %v301 = vadd.f32 %v149, %v300
    %302 = vmatmul.f32.gmra.mxu0 %v189
    %v303 = vpop.f32.mrf.mxu0
    %v304 = vadd.f32 %v149, %v303
    %305 = vdwg.mxu0
    %306 = vmatpush.msra.mxu0 0.0
    %307 = vmatpush.msra.mxu0 0.0
    %308 = vmatpush.msra.mxu0 0.0
    %309 = vmatpush.msra.mxu0 0.0
    %310 = vmatpush.msra.mxu0 0.0
    %311 = vmatpush.msra.mxu0 0.0
    %312 = vmatpush.msra.mxu0 0.0
    %313 = vmatpush.msra.mxu0 0.0
    %314 = vmatpush.msra.mxu0 0.0
    %315 = vmatpush.msra.mxu0 0.0
    %316 = vmatpush.msra.mxu0 0.0
    %317 = vmatpush.msra.mxu0 0.0
    %318 = vmatpush.msra.mxu0 0.0
    %319 = vmatpush.msra.mxu0 0.0
    %320 = vmatpush.msra.mxu0 %v140
    %321 = vmatpush.msra.mxu0 %v132
    %322 = vmatmul.f32.gmra.mxu0 %v187
    %v323 = vpop.f32.mrf.mxu0
    %v324 = vadd.f32 %v150, %v323
    %325 = vmatmul.f32.gmra.mxu0 %v189
    %v326 = vpop.f32.mrf.mxu0
    %v327 = vadd.f32 %v150, %v326
    %328 = vdwg.mxu0
    %329 = vmatpush.msra.mxu0 0.0
    %330 = vmatpush.msra.mxu0 0.0
    %331 = vmatpush.msra.mxu0 0.0
    %332 = vmatpush.msra.mxu0 0.0
    %333 = vmatpush.msra.mxu0 0.0
    %334 = vmatpush.msra.mxu0 0.0
    %335 = vmatpush.msra.mxu0 0.0
    %336 = vmatpush.msra.mxu0 0.0
    %337 = vmatpush.msra.mxu0 0.0
    %338 = vmatpush.msra.mxu0 0.0
    %339 = vmatpush.msra.mxu0 0.0
    %340 = vmatpush.msra.mxu0 0.0
    %341 = vmatpush.msra.mxu0 0.0
    %342 = vmatpush.msra.mxu0 0.0
    %343 = vmatpush.msra.mxu0 %v141
    %344 = vmatpush.msra.mxu0 %v133
    %345 = vmatmul.f32.gmra.mxu0 %v187
    %v346 = vpop.f32.mrf.mxu0
    %v347 = vadd.f32 %v151, %v346
    %348 = vmatmul.f32.gmra.mxu0 %v189
    %v349 = vpop.f32.mrf.mxu0
    %v350 = vadd.f32 %v151, %v349
    %351 = vdwg.mxu0
    %352 = vmatpush.msra.mxu0 0.0
    %353 = vmatpush.msra.mxu0 0.0
    %354 = vmatpush.msra.mxu0 0.0
    %355 = vmatpush.msra.mxu0 0.0
    %356 = vmatpush.msra.mxu0 0.0
    %357 = vmatpush.msra.mxu0 0.0
    %358 = vmatpush.msra.mxu0 0.0
    %359 = vmatpush.msra.mxu0 0.0
    %360 = vmatpush.msra.mxu0 0.0
    %361 = vmatpush.msra.mxu0 0.0
    %362 = vmatpush.msra.mxu0 0.0
    %363 = vmatpush.msra.mxu0 0.0
    %364 = vmatpush.msra.mxu0 0.0
    %365 = vmatpush.msra.mxu0 0.0
    %366 = vmatpush.msra.mxu0 %v142
    %367 = vmatpush.msra.mxu0 %v134
    %368 = vmatmul.f32.gmra.mxu0 %v187
    %v369 = vpop.f32.mrf.mxu0
    %v370 = vadd.f32 %v152, %v369
    %371 = vmatmul.f32.gmra.mxu0 %v189
    %v372 = vpop.f32.mrf.mxu0
    %v373 = vadd.f32 %v152, %v372
    %374 = vdwg.mxu0
    %v391 = vrot.slane %v232, 6
    %v392 = vrot.slane %v255, 4
    %v393 = vrot.slane %v278, 2
    %v394 = vrot.slane %v324, 6
    %v395 = vrot.slane %v347, 4
    %v396 = vrot.slane %v370, 2
    %v397 = vrot.slane %v235, 6
    %v398 = vrot.slane %v258, 4
    %v399 = vrot.slane %v281, 2
    %v400 = vrot.slane %v327, 6
    %v401 = vrot.slane %v350, 4
    %v402 = vrot.slane %v373, 2
    %vm403 = vcmask 1041408
    %v404 = vsel %vm403, %v209, %v391
    %vm405 = vcmask 1045508
    %v406 = vsel %vm405, %v392, %v393
    %vm407 = vcmask 1043456
    %v408 = vsel %vm407, %v404, %v406
    %v409 = vsel %vm403, %v301, %v394
    %v410 = vsel %vm405, %v395, %v396
    %v411 = vsel %vm407, %v409, %v410
    %vm412 = vcmask 1043458
    %v413 = vsel %vm412, %v209, %v391
    %vm414 = vcmask 1045504
    %v415 = vsel %vm414, %v393, %v392
    %vm416 = vcmask 1045506
    %v417 = vsel %vm416, %v413, %v415
    %v418 = vrot.slane %v417, 2
    %v419 = vsel %vm412, %v301, %v394
    %v420 = vsel %vm414, %v396, %v395
    %v421 = vsel %vm416, %v419, %v420
    %v422 = vrot.slane %v421, 2
    %v423 = vsel %vm405, %v209, %v391
    %v424 = vsel %vm403, %v392, %v393
    %v425 = vsel %vm407, %v424, %v423
    %v426 = vrot.slane %v425, 4
    %v427 = vsel %vm405, %v301, %v394
    %v428 = vsel %vm403, %v395, %v396
    %v429 = vsel %vm407, %v428, %v427
    %v430 = vrot.slane %v429, 4
    %v431 = vsel %vm414, %v391, %v209
    %v432 = vsel %vm412, %v392, %v393
    %v433 = vsel %vm416, %v432, %v431
    %v434 = vrot.slane %v433, 6
    %v435 = vsel %vm414, %v394, %v301
    %v436 = vsel %vm412, %v395, %v396
    %v437 = vsel %vm416, %v436, %v435
    %v438 = vrot.slane %v437, 6
    %v439 = vsel %vm403, %v212, %v397
    %v440 = vsel %vm405, %v398, %v399
    %v441 = vsel %vm407, %v439, %v440
    %v442 = vsel %vm403, %v304, %v400
    %v443 = vsel %vm405, %v401, %v402
    %v444 = vsel %vm407, %v442, %v443
    %v445 = vsel %vm412, %v212, %v397
    %v446 = vsel %vm414, %v399, %v398
    %v447 = vsel %vm416, %v445, %v446
    %v448 = vrot.slane %v447, 2
    %v449 = vsel %vm412, %v304, %v400
    %v450 = vsel %vm414, %v402, %v401
    %v451 = vsel %vm416, %v449, %v450
    %v452 = vrot.slane %v451, 2
    %v453 = vsel %vm405, %v212, %v397
    %v454 = vsel %vm403, %v398, %v399
    %v455 = vsel %vm407, %v454, %v453
    %v456 = vrot.slane %v455, 4
    %v457 = vsel %vm405, %v304, %v400
    %v458 = vsel %vm403, %v401, %v402
    %v459 = vsel %vm407, %v458, %v457
    %v460 = vrot.slane %v459, 4
    %v461 = vsel %vm414, %v397, %v212
    %v462 = vsel %vm412, %v398, %v399
    %v463 = vsel %vm416, %v462, %v461
    %v464 = vrot.slane %v463, 6
    %v465 = vsel %vm414, %v400, %v304
    %v466 = vsel %vm412, %v401, %v402
    %v467 = vsel %vm416, %v466, %v465
    %v468 = vrot.slane %v467, 6
    %485 = vst [vmem:[#allocation2] sm:$0xff] %v408
    %486 = vst [vmem:[#allocation2 + $0x8] sm:$0xff] %v411
    %487 = vst [vmem:[#allocation2 + $0x10] sm:$0xff] %v418
    %488 = vst [vmem:[#allocation2 + $0x18] sm:$0xff] %v422
    %489 = vst [vmem:[#allocation2 + $0x20] sm:$0xff] %v426
    %490 = vst [vmem:[#allocation2 + $0x28] sm:$0xff] %v430
    %491 = vst [vmem:[#allocation2 + $0x30] sm:$0xff] %v434
    %492 = vst [vmem:[#allocation2 + $0x38] sm:$0xff] %v438
    %493 = vst [vmem:[#allocation2 + $0x40] sm:$0xff] %v441
    %494 = vst [vmem:[#allocation2 + $0x48] sm:$0xff] %v444
    %495 = vst [vmem:[#allocation2 + $0x50] sm:$0xff] %v448
    %496 = vst [vmem:[#allocation2 + $0x58] sm:$0xff] %v452
    %497 = vst [vmem:[#allocation2 + $0x60] sm:$0xff] %v456
    %498 = vst [vmem:[#allocation2 + $0x68] sm:$0xff] %v460
    %499 = vst [vmem:[#allocation2 + $0x70] sm:$0xff] %v464
    %500 = vst [vmem:[#allocation2 + $0x78] sm:$0xff] %v468
    %501 = vst [vmem:[#allocation4] sm:$0x3] 0.0
    %502 = vst [vmem:[#allocation5] sm:$0x3] 0.0
    %503 = vst [vmem:[#allocation6] sm:$0x3] 0.0
    %504 = vst [vmem:[#allocation7] sm:$0x3] 0.0
    %v505 = vld [vmem:[#allocation13] sm:$0xff]
    %v506 = vld [vmem:[#allocation13 + $0x8] sm:$0xff]
    %v507 = vld [vmem:[#allocation13 + $0x10] sm:$0xff]
    %v508 = vld [vmem:[#allocation13 + $0x18] sm:$0xff]
    %v509 = vld [vmem:[#allocation13 + $0x20] sm:$0xff]
    %v510 = vld [vmem:[#allocation13 + $0x28] sm:$0xff]
    %v511 = vld [vmem:[#allocation13 + $0x30] sm:$0xff]
    %v512 = vld [vmem:[#allocation13 + $0x38] sm:$0xff]
    %v513 = vld [vmem:[#allocation13 + $0x40] sm:$0xff]
    %v514 = vld [vmem:[#allocation13 + $0x48] sm:$0xff]
    %v515 = vld [vmem:[#allocation13 + $0x50] sm:$0xff]
    %v516 = vld [vmem:[#allocation13 + $0x58] sm:$0xff]
    %v517 = vld [vmem:[#allocation13 + $0x60] sm:$0xff]
    %v518 = vld [vmem:[#allocation13 + $0x68] sm:$0xff]
    %v519 = vld [vmem:[#allocation13 + $0x70] sm:$0xff]
    %v520 = vld [vmem:[#allocation13 + $0x78] sm:$0xff]
    %v521 = vld [vmem:[#allocation13 + $0x80] sm:$0xff]
    %v522 = vld [vmem:[#allocation13 + $0x88] sm:$0xff]
    %v523 = vld [vmem:[#allocation13 + $0x90] sm:$0xff]
    %v524 = vld [vmem:[#allocation13 + $0x98] sm:$0xff]
    %v525 = vld [vmem:[#allocation13 + $0xa0] sm:$0xff]
    %v526 = vld [vmem:[#allocation13 + $0xa8] sm:$0xff]
    %v527 = vld [vmem:[#allocation13 + $0xb0] sm:$0xff]
    %v528 = vld [vmem:[#allocation13 + $0xb8] sm:$0xff]
    %v529 = vld [vmem:[#allocation13 + $0xc0] sm:$0xff]
    %v530 = vld [vmem:[#allocation13 + $0xc8] sm:$0xff]
    %v531 = vld [vmem:[#allocation13 + $0xd0] sm:$0xff]
    %v532 = vld [vmem:[#allocation13 + $0xd8] sm:$0xff]
    %v533 = vld [vmem:[#allocation13 + $0xe0] sm:$0xff]
    %v534 = vld [vmem:[#allocation13 + $0xe8] sm:$0xff]
    %v535 = vld [vmem:[#allocation13 + $0xf0] sm:$0xff]
    %v536 = vld [vmem:[#allocation13 + $0xf8] sm:$0xff]
    %v537 = vld [vmem:[#allocation13 + $0x100] sm:$0xff]
    %v538 = vld [vmem:[#allocation13 + $0x108] sm:$0xff]
    %v539 = vld [vmem:[#allocation13 + $0x110] sm:$0xff]
    %v540 = vld [vmem:[#allocation13 + $0x118] sm:$0xff]
    %v541 = vld [vmem:[#allocation13 + $0x120] sm:$0xff]
    %v542 = vld [vmem:[#allocation13 + $0x128] sm:$0xff]
    %v543 = vld [vmem:[#allocation13 + $0x130] sm:$0xff]
    %v544 = vld [vmem:[#allocation13 + $0x138] sm:$0xff]
    %v545 = vld [vmem:[#allocation13 + $0x140] sm:$0xff]
    %v546 = vld [vmem:[#allocation13 + $0x148] sm:$0xff]
    %v547 = vld [vmem:[#allocation13 + $0x150] sm:$0xff]
    %v548 = vld [vmem:[#allocation13 + $0x158] sm:$0xff]
    %v549 = vld [vmem:[#allocation13 + $0x160] sm:$0xff]
    %v550 = vld [vmem:[#allocation13 + $0x168] sm:$0xff]
    %v551 = vld [vmem:[#allocation13 + $0x170] sm:$0xff]
    %v552 = vld [vmem:[#allocation13 + $0x178] sm:$0xff]
    %v553 = vld [vmem:[#allocation13 + $0x180] sm:$0xff]
    %v554 = vld [vmem:[#allocation13 + $0x188] sm:$0xff]
    %v555 = vld [vmem:[#allocation13 + $0x190] sm:$0xff]
    %v556 = vld [vmem:[#allocation13 + $0x198] sm:$0xff]
    %v557 = vld [vmem:[#allocation13 + $0x1a0] sm:$0xff]
    %v558 = vld [vmem:[#allocation13 + $0x1a8] sm:$0xff]
    %v559 = vld [vmem:[#allocation13 + $0x1b0] sm:$0xff]
    %v560 = vld [vmem:[#allocation13 + $0x1b8] sm:$0xff]
    %v561 = vld [vmem:[#allocation13 + $0x1c0] sm:$0xff]
    %v562 = vld [vmem:[#allocation13 + $0x1c8] sm:$0xff]
    %v563 = vld [vmem:[#allocation13 + $0x1d0] sm:$0xff]
    %v564 = vld [vmem:[#allocation13 + $0x1d8] sm:$0xff]
    %v565 = vld [vmem:[#allocation13 + $0x1e0] sm:$0xff]
    %v566 = vld [vmem:[#allocation13 + $0x1e8] sm:$0xff]
    %v567 = vld [vmem:[#allocation13 + $0x1f0] sm:$0xff]
    %v568 = vld [vmem:[#allocation13 + $0x1f8] sm:$0xff]
    %v569 = vld [vmem:[#allocation14] sm:$0xff]
    %v570 = vld [vmem:[#allocation14 + $0x8] sm:$0xff]
    %v571 = vld [vmem:[#allocation14 + $0x10] sm:$0xff]
    %v572 = vld [vmem:[#allocation14 + $0x18] sm:$0xff]
    %v573 = vld [vmem:[#allocation14 + $0x20] sm:$0xff]
    %v574 = vld [vmem:[#allocation14 + $0x28] sm:$0xff]
    %v575 = vld [vmem:[#allocation14 + $0x30] sm:$0xff]
    %v576 = vld [vmem:[#allocation14 + $0x38] sm:$0xff]
    %v577 = vld [vmem:[#allocation14 + $0x40] sm:$0xff]
    %v578 = vld [vmem:[#allocation14 + $0x48] sm:$0xff]
    %v579 = vld [vmem:[#allocation14 + $0x50] sm:$0xff]
    %v580 = vld [vmem:[#allocation14 + $0x58] sm:$0xff]
    %v581 = vld [vmem:[#allocation14 + $0x60] sm:$0xff]
    %v582 = vld [vmem:[#allocation14 + $0x68] sm:$0xff]
    %v583 = vld [vmem:[#allocation14 + $0x70] sm:$0xff]
    %v584 = vld [vmem:[#allocation14 + $0x78] sm:$0xff]
    %v585 = vld [vmem:[#allocation14 + $0x80] sm:$0xff]
    %v586 = vld [vmem:[#allocation14 + $0x88] sm:$0xff]
    %v587 = vld [vmem:[#allocation14 + $0x90] sm:$0xff]
    %v588 = vld [vmem:[#allocation14 + $0x98] sm:$0xff]
    %v589 = vld [vmem:[#allocation14 + $0xa0] sm:$0xff]
    %v590 = vld [vmem:[#allocation14 + $0xa8] sm:$0xff]
    %v591 = vld [vmem:[#allocation14 + $0xb0] sm:$0xff]
    %v592 = vld [vmem:[#allocation14 + $0xb8] sm:$0xff]
    %v593 = vld [vmem:[#allocation14 + $0xc0] sm:$0xff]
    %v594 = vld [vmem:[#allocation14 + $0xc8] sm:$0xff]
    %v595 = vld [vmem:[#allocation14 + $0xd0] sm:$0xff]
    %v596 = vld [vmem:[#allocation14 + $0xd8] sm:$0xff]
    %v597 = vld [vmem:[#allocation14 + $0xe0] sm:$0xff]
    %v598 = vld [vmem:[#allocation14 + $0xe8] sm:$0xff]
    %v599 = vld [vmem:[#allocation14 + $0xf0] sm:$0xff]
    %v600 = vld [vmem:[#allocation14 + $0xf8] sm:$0xff]
    %v601 = vld [vmem:[#allocation14 + $0x100] sm:$0xff]
    %v602 = vld [vmem:[#allocation14 + $0x108] sm:$0xff]
    %v603 = vld [vmem:[#allocation14 + $0x110] sm:$0xff]
    %v604 = vld [vmem:[#allocation14 + $0x118] sm:$0xff]
    %v605 = vld [vmem:[#allocation14 + $0x120] sm:$0xff]
    %v606 = vld [vmem:[#allocation14 + $0x128] sm:$0xff]
    %v607 = vld [vmem:[#allocation14 + $0x130] sm:$0xff]
    %v608 = vld [vmem:[#allocation14 + $0x138] sm:$0xff]
    %v609 = vld [vmem:[#allocation14 + $0x140] sm:$0xff]
    %v610 = vld [vmem:[#allocation14 + $0x148] sm:$0xff]
    %v611 = vld [vmem:[#allocation14 + $0x150] sm:$0xff]
    %v612 = vld [vmem:[#allocation14 + $0x158] sm:$0xff]
    %v613 = vld [vmem:[#allocation14 + $0x160] sm:$0xff]
    %v614 = vld [vmem:[#allocation14 + $0x168] sm:$0xff]
    %v615 = vld [vmem:[#allocation14 + $0x170] sm:$0xff]
    %v616 = vld [vmem:[#allocation14 + $0x178] sm:$0xff]
    %v617 = vld [vmem:[#allocation14 + $0x180] sm:$0xff]
    %v618 = vld [vmem:[#allocation14 + $0x188] sm:$0xff]
    %v619 = vld [vmem:[#allocation14 + $0x190] sm:$0xff]
    %v620 = vld [vmem:[#allocation14 + $0x198] sm:$0xff]
    %v621 = vld [vmem:[#allocation14 + $0x1a0] sm:$0xff]
    %v622 = vld [vmem:[#allocation14 + $0x1a8] sm:$0xff]
    %v623 = vld [vmem:[#allocation14 + $0x1b0] sm:$0xff]
    %v624 = vld [vmem:[#allocation14 + $0x1b8] sm:$0xff]
    %v625 = vld [vmem:[#allocation14 + $0x1c0] sm:$0xff]
    %v626 = vld [vmem:[#allocation14 + $0x1c8] sm:$0xff]
    %v627 = vld [vmem:[#allocation14 + $0x1d0] sm:$0xff]
    %v628 = vld [vmem:[#allocation14 + $0x1d8] sm:$0xff]
    %v629 = vld [vmem:[#allocation14 + $0x1e0] sm:$0xff]
    %v630 = vld [vmem:[#allocation14 + $0x1e8] sm:$0xff]
    %v631 = vld [vmem:[#allocation14 + $0x1f0] sm:$0xff]
    %v632 = vld [vmem:[#allocation14 + $0x1f8] sm:$0xff]
    loop: start=0, step=1, limit=8
    $region54: #{tpu_custom_call.1} parent=1 // loop_pre_header
      _
    $region55: #{tpu_custom_call.1} parent=1 // loop_header
      %s634 = sphi 0, %s638
      %p635 = scmp.ge.s32.totalorder %s634, 8
    $region56: #{tpu_custom_call.1} parent=1 // loop_header_branch
      %637 = sbr.rel (%p635) target = $region60
    $region57: #{tpu_custom_call.1} parent=1 // loop_body
      %s639 = ssub.s32 7, %s634
      %s640 = smul.u32 %s634, 8
      %s641 = smul.addr %s640, 2
      %s642 = scalar_lea.vmem [#allocation2], %s641
      %v643 = vld [vmem:[%s642] sm:$0xff]
      %s644 = smul.u32 %s639, 8
      %s645 = smul.addr %s644, 2
      %s646 = scalar_lea.vmem [#allocation2], %s645
      %v647 = vld [vmem:[%s646 + $0x8] sm:$0xff]
      %v648 = vld [vmem:[#allocation4] sm:$0x3]
      %649 = vmatpush.msra.mxu0 %v565
      %650 = vmatpush.msra.mxu0 %v561
      %651 = vmatpush.msra.mxu0 %v557
      %652 = vmatpush.msra.mxu0 %v553
      %653 = vmatpush.msra.mxu0 %v549
      %654 = vmatpush.msra.mxu0 %v545
      %655 = vmatpush.msra.mxu0 %v541
      %656 = vmatpush.msra.mxu0 %v537
      %657 = vmatpush.msra.mxu0 %v533
      %658 = vmatpush.msra.mxu0 %v529
      %659 = vmatpush.msra.mxu0 %v525
      %660 = vmatpush.msra.mxu0 %v521
      %661 = vmatpush.msra.mxu0 %v517
      %662 = vmatpush.msra.mxu0 %v513
      %663 = vmatpush.msra.mxu0 %v509
      %664 = vmatpush.msra.mxu0 %v505
      %665 = vmatmul.f32.gmra.mxu0 %v648
      %v666 = vpop.f32.mrf.mxu0
      %v667 = vadd.f32 0.0, %v666
      %668 = vdwg.mxu0
      %669 = vmatpush.msra.mxu0 %v566
      %670 = vmatpush.msra.mxu0 %v562
      %671 = vmatpush.msra.mxu0 %v558
      %672 = vmatpush.msra.mxu0 %v554
      %673 = vmatpush.msra.mxu0 %v550
      %674 = vmatpush.msra.mxu0 %v546
      %675 = vmatpush.msra.mxu0 %v542
      %676 = vmatpush.msra.mxu0 %v538
      %677 = vmatpush.msra.mxu0 %v534
      %678 = vmatpush.msra.mxu0 %v530
      %679 = vmatpush.msra.mxu0 %v526
      %680 = vmatpush.msra.mxu0 %v522
      %681 = vmatpush.msra.mxu0 %v518
      %682 = vmatpush.msra.mxu0 %v514
      %683 = vmatpush.msra.mxu0 %v510
      %684 = vmatpush.msra.mxu0 %v506
      %685 = vmatmul.f32.gmra.mxu0 %v648
      %v686 = vpop.f32.mrf.mxu0
      %v687 = vadd.f32 0.0, %v686
      %688 = vdwg.mxu0
      %689 = vmatpush.msra.mxu0 %v567
      %690 = vmatpush.msra.mxu0 %v563
      %691 = vmatpush.msra.mxu0 %v559
      %692 = vmatpush.msra.mxu0 %v555
      %693 = vmatpush.msra.mxu0 %v551
      %694 = vmatpush.msra.mxu0 %v547
      %695 = vmatpush.msra.mxu0 %v543
      %696 = vmatpush.msra.mxu0 %v539
      %697 = vmatpush.msra.mxu0 %v535
      %698 = vmatpush.msra.mxu0 %v531
      %699 = vmatpush.msra.mxu0 %v527
      %700 = vmatpush.msra.mxu0 %v523
      %701 = vmatpush.msra.mxu0 %v519
      %702 = vmatpush.msra.mxu0 %v515
      %703 = vmatpush.msra.mxu0 %v511
      %704 = vmatpush.msra.mxu0 %v507
      %705 = vmatmul.f32.gmra.mxu0 %v648
      %v706 = vpop.f32.mrf.mxu0
      %v707 = vadd.f32 0.0, %v706
      %708 = vdwg.mxu0
      %709 = vmatpush.msra.mxu0 %v568
      %710 = vmatpush.msra.mxu0 %v564
      %711 = vmatpush.msra.mxu0 %v560
      %712 = vmatpush.msra.mxu0 %v556
      %713 = vmatpush.msra.mxu0 %v552
      %714 = vmatpush.msra.mxu0 %v548
      %715 = vmatpush.msra.mxu0 %v544
      %716 = vmatpush.msra.mxu0 %v540
      %717 = vmatpush.msra.mxu0 %v536
      %718 = vmatpush.msra.mxu0 %v532
      %719 = vmatpush.msra.mxu0 %v528
      %720 = vmatpush.msra.mxu0 %v524
      %721 = vmatpush.msra.mxu0 %v520
      %722 = vmatpush.msra.mxu0 %v516
      %723 = vmatpush.msra.mxu0 %v512
      %724 = vmatpush.msra.mxu0 %v508
      %725 = vmatmul.f32.gmra.mxu0 %v648
      %v726 = vpop.f32.mrf.mxu0
      %v727 = vadd.f32 0.0, %v726
      %728 = vdwg.mxu0
      %v733 = vrot.slane %v687, 6
      %v734 = vrot.slane %v707, 4
      %v735 = vrot.slane %v727, 2
      %v736 = vsel %vm403, %v667, %v733
      %v737 = vsel %vm405, %v734, %v735
      %v738 = vsel %vm407, %v736, %v737
      %v740 = vadd.f32 %v643, %v738
      %v741 = vld [vmem:[#allocation6] sm:$0x3]
      %742 = vmatpush.msra.mxu0 %v629
      %743 = vmatpush.msra.mxu0 %v625
      %744 = vmatpush.msra.mxu0 %v621
      %745 = vmatpush.msra.mxu0 %v617
      %746 = vmatpush.msra.mxu0 %v613
      %747 = vmatpush.msra.mxu0 %v609
      %748 = vmatpush.msra.mxu0 %v605
      %749 = vmatpush.msra.mxu0 %v601
      %750 = vmatpush.msra.mxu0 %v597
      %751 = vmatpush.msra.mxu0 %v593
      %752 = vmatpush.msra.mxu0 %v589
      %753 = vmatpush.msra.mxu0 %v585
      %754 = vmatpush.msra.mxu0 %v581
      %755 = vmatpush.msra.mxu0 %v577
      %756 = vmatpush.msra.mxu0 %v573
      %757 = vmatpush.msra.mxu0 %v569
      %758 = vmatmul.f32.gmra.mxu0 %v741
      %v759 = vpop.f32.mrf.mxu0
      %v760 = vadd.f32 0.0, %v759
      %761 = vdwg.mxu0
      %762 = vmatpush.msra.mxu0 %v630
      %763 = vmatpush.msra.mxu0 %v626
      %764 = vmatpush.msra.mxu0 %v622
      %765 = vmatpush.msra.mxu0 %v618
      %766 = vmatpush.msra.mxu0 %v614
      %767 = vmatpush.msra.mxu0 %v610
      %768 = vmatpush.msra.mxu0 %v606
      %769 = vmatpush.msra.mxu0 %v602
      %770 = vmatpush.msra.mxu0 %v598
      %771 = vmatpush.msra.mxu0 %v594
      %772 = vmatpush.msra.mxu0 %v590
      %773 = vmatpush.msra.mxu0 %v586
      %774 = vmatpush.msra.mxu0 %v582
      %775 = vmatpush.msra.mxu0 %v578
      %776 = vmatpush.msra.mxu0 %v574
      %777 = vmatpush.msra.mxu0 %v570
      %778 = vmatmul.f32.gmra.mxu0 %v741
      %v779 = vpop.f32.mrf.mxu0
      %v780 = vadd.f32 0.0, %v779
      %781 = vdwg.mxu0
      %782 = vmatpush.msra.mxu0 %v631
      %783 = vmatpush.msra.mxu0 %v627
      %784 = vmatpush.msra.mxu0 %v623
      %785 = vmatpush.msra.mxu0 %v619
      %786 = vmatpush.msra.mxu0 %v615
      %787 = vmatpush.msra.mxu0 %v611
      %788 = vmatpush.msra.mxu0 %v607
      %789 = vmatpush.msra.mxu0 %v603
      %790 = vmatpush.msra.mxu0 %v599
      %791 = vmatpush.msra.mxu0 %v595
      %792 = vmatpush.msra.mxu0 %v591
      %793 = vmatpush.msra.mxu0 %v587
      %794 = vmatpush.msra.mxu0 %v583
      %795 = vmatpush.msra.mxu0 %v579
      %796 = vmatpush.msra.mxu0 %v575
      %797 = vmatpush.msra.mxu0 %v571
      %798 = vmatmul.f32.gmra.mxu0 %v741
      %v799 = vpop.f32.mrf.mxu0
      %v800 = vadd.f32 0.0, %v799
      %801 = vdwg.mxu0
      %802 = vmatpush.msra.mxu0 %v632
      %803 = vmatpush.msra.mxu0 %v628
      %804 = vmatpush.msra.mxu0 %v624
      %805 = vmatpush.msra.mxu0 %v620
      %806 = vmatpush.msra.mxu0 %v616
      %807 = vmatpush.msra.mxu0 %v612
      %808 = vmatpush.msra.mxu0 %v608
      %809 = vmatpush.msra.mxu0 %v604
      %810 = vmatpush.msra.mxu0 %v600
      %811 = vmatpush.msra.mxu0 %v596
      %812 = vmatpush.msra.mxu0 %v592
      %813 = vmatpush.msra.mxu0 %v588
      %814 = vmatpush.msra.mxu0 %v584
      %815 = vmatpush.msra.mxu0 %v580
      %816 = vmatpush.msra.mxu0 %v576
      %817 = vmatpush.msra.mxu0 %v572
      %818 = vmatmul.f32.gmra.mxu0 %v741
      %v819 = vpop.f32.mrf.mxu0
      %v820 = vadd.f32 0.0, %v819
      %821 = vdwg.mxu0
      %v826 = vrot.slane %v780, 6
      %v827 = vrot.slane %v800, 4
      %v828 = vrot.slane %v820, 2
      %v829 = vsel %vm403, %v760, %v826
      %v830 = vsel %vm405, %v827, %v828
      %v831 = vsel %vm407, %v829, %v830
      %v833 = vadd.f32 %v647, %v831
      %v834 = vld [vmem:[#allocation5] sm:$0x3]
      %v835 = vxor.u32 %v740, 2147483648
      %v836 = vmul.f32 %v835, 1.442695
      %v837 = vpow.pop %v836
      %v838 = vadd.f32 %v837, 1.0
      %v839 = vrcp.pop %v838
      %v840 = vmul.f32 %v838, %v839
      %v841 = vsub.f32 1.0, %v840
      %v842 = vmul.f32 %v839, %v841
      %v843 = vadd.f32 %v839, %v842
      %vm844 = vweird.f32 %v838
      %vm845 = vweird.f32 %v839
      %vm846 = vmor %vm844, %vm845
      %v847 = vsel %vm846, %v839, %v843
      %v848 = vand.u32 2147483647, %v838
      %vm849 = vcmp.eq.f32.partialorder %v848, 8.507059e+37
      %v850 = vand.u32 %v838, 2147483648
      %v851 = vor.u32 1.1754944e-38, %v850
      %v852 = vsel %vm849, %v851, %v847
      %v853 = vmul.f32 1.0, %v852
      %v855 = vrot.slane %v740, 2
      %v857 = vxor.u32 %v855, 2147483648
      %v858 = vmul.f32 %v857, 1.442695
      %v859 = vpow.pop %v858
      %v860 = vadd.f32 %v859, 1.0
      %v861 = vrcp.pop %v860
      %v862 = vmul.f32 %v860, %v861
      %v863 = vsub.f32 1.0, %v862
      %v864 = vmul.f32 %v861, %v863
      %v865 = vadd.f32 %v861, %v864
      %vm866 = vweird.f32 %v860
      %vm867 = vweird.f32 %v861
      %vm868 = vmor %vm866, %vm867
      %v869 = vsel %vm868, %v861, %v865
      %v870 = vand.u32 2147483647, %v860
      %vm871 = vcmp.eq.f32.partialorder %v870, 8.507059e+37
      %v872 = vand.u32 %v860, 2147483648
      %v873 = vor.u32 1.1754944e-38, %v872
      %v874 = vsel %vm871, %v873, %v869
      %v875 = vmul.f32 1.0, %v874
      %v876 = vrot.slane %v740, 4
      %v878 = vtanh.pop %v876
      %v879 = vrot.slane %v740, 6
      %v881 = vxor.u32 %v879, 2147483648
      %v882 = vmul.f32 %v881, 1.442695
      %v883 = vpow.pop %v882
      %v884 = vadd.f32 %v883, 1.0
      %v885 = vrcp.pop %v884
      %v886 = vmul.f32 %v884, %v885
      %v887 = vsub.f32 1.0, %v886
      %v888 = vmul.f32 %v885, %v887
      %v889 = vadd.f32 %v885, %v888
      %vm890 = vweird.f32 %v884
      %vm891 = vweird.f32 %v885
      %vm892 = vmor %vm890, %vm891
      %v893 = vsel %vm892, %v885, %v889
      %v894 = vand.u32 2147483647, %v884
      %vm895 = vcmp.eq.f32.partialorder %v894, 8.507059e+37
      %v896 = vand.u32 %v884, 2147483648
      %v897 = vor.u32 1.1754944e-38, %v896
      %v898 = vsel %vm895, %v897, %v893
      %v899 = vmul.f32 1.0, %v898
      %v900 = vmul.f32 %v875, %v834
      %v901 = vmul.f32 %v853, %v878
      %v902 = vadd.f32 %v900, %v901
      %v903 = vtanh.pop %v902
      %v904 = vmul.f32 %v899, %v903
      %v905 = vld [vmem:[#allocation7] sm:$0x3]
      %v906 = vxor.u32 %v833, 2147483648
      %v907 = vmul.f32 %v906, 1.442695
      %v908 = vpow.pop %v907
      %v909 = vadd.f32 %v908, 1.0
      %v910 = vrcp.pop %v909
      %v911 = vmul.f32 %v909, %v910
      %v912 = vsub.f32 1.0, %v911
      %v913 = vmul.f32 %v910, %v912
      %v914 = vadd.f32 %v910, %v913
      %vm915 = vweird.f32 %v909
      %vm916 = vweird.f32 %v910
      %vm917 = vmor %vm915, %vm916
      %v918 = vsel %vm917, %v910, %v914
      %v919 = vand.u32 2147483647, %v909
      %vm920 = vcmp.eq.f32.partialorder %v919, 8.507059e+37
      %v921 = vand.u32 %v909, 2147483648
      %v922 = vor.u32 1.1754944e-38, %v921
      %v923 = vsel %vm920, %v922, %v918
      %v924 = vmul.f32 1.0, %v923
      %v926 = vrot.slane %v833, 2
      %v928 = vxor.u32 %v926, 2147483648
      %v929 = vmul.f32 %v928, 1.442695
      %v930 = vpow.pop %v929
      %v931 = vadd.f32 %v930, 1.0
      %v932 = vrcp.pop %v931
      %v933 = vmul.f32 %v931, %v932
      %v934 = vsub.f32 1.0, %v933
      %v935 = vmul.f32 %v932, %v934
      %v936 = vadd.f32 %v932, %v935
      %vm937 = vweird.f32 %v931
      %vm938 = vweird.f32 %v932
      %vm939 = vmor %vm937, %vm938
      %v940 = vsel %vm939, %v932, %v936
      %v941 = vand.u32 2147483647, %v931
      %vm942 = vcmp.eq.f32.partialorder %v941, 8.507059e+37
      %v943 = vand.u32 %v931, 2147483648
      %v944 = vor.u32 1.1754944e-38, %v943
      %v945 = vsel %vm942, %v944, %v940
      %v946 = vmul.f32 1.0, %v945
      %v947 = vrot.slane %v833, 4
      %v949 = vtanh.pop %v947
      %v950 = vrot.slane %v833, 6
      %v952 = vxor.u32 %v950, 2147483648
      %v953 = vmul.f32 %v952, 1.442695
      %v954 = vpow.pop %v953
      %v955 = vadd.f32 %v954, 1.0
      %v956 = vrcp.pop %v955
      %v957 = vmul.f32 %v955, %v956
      %v958 = vsub.f32 1.0, %v957
      %v959 = vmul.f32 %v956, %v958
      %v960 = vadd.f32 %v956, %v959
      %vm961 = vweird.f32 %v955
      %vm962 = vweird.f32 %v956
      %vm963 = vmor %vm961, %vm962
      %v964 = vsel %vm963, %v956, %v960
      %v965 = vand.u32 2147483647, %v955
      %vm966 = vcmp.eq.f32.partialorder %v965, 8.507059e+37
      %v967 = vand.u32 %v955, 2147483648
      %v968 = vor.u32 1.1754944e-38, %v967
      %v969 = vsel %vm966, %v968, %v964
      %v970 = vmul.f32 1.0, %v969
      %v971 = vmul.f32 %v946, %v905
      %v972 = vmul.f32 %v924, %v949
      %v973 = vadd.f32 %v971, %v972
      %v974 = vtanh.pop %v973
      %v975 = vmul.f32 %v970, %v974
      %976 = vst [vmem:[#allocation4] sm:$0x3] %v904
      %977 = vst [vmem:[#allocation5] sm:$0x3] %v902
      %978 = vst [vmem:[#allocation6] sm:$0x3] %v975
      %979 = vst [vmem:[#allocation7] sm:$0x3] %v973
      %s980 = smul.u32 %s634, 2
      %s981 = smul.addr %s980, 2
      %s982 = scalar_lea.vmem [#allocation3], %s981
      %983 = vst [vmem:[%s982] sm:$0x3] %v904
      %s984 = smul.u32 %s639, 2
      %s985 = smul.addr %s984, 2
      %s986 = scalar_lea.vmem [#allocation3], %s985
      %987 = vst [vmem:[%s986 + $0x2] sm:$0x3] %v975
    $region58: #{tpu_custom_call.1} parent=1 // loop_footer
      %s638 = sadd.s32 1, %s634
    $region59: #{tpu_custom_call.1} parent=1 // loop_footer_branch
      %633 = sbr.rel target = $region55
    $region60: #{tpu_custom_call.1} parent=1 // loop_exit
      _
    %v988 = vld [vmem:[#allocation3] sm:$0xf]
    %v989 = vld [vmem:[#allocation3 + $0x4] sm:$0xf]
    %v990 = vld [vmem:[#allocation3 + $0x8] sm:$0xf]
    %v991 = vld [vmem:[#allocation3 + $0xc] sm:$0xf]
    %v992 = vld [vmem:[#allocation3 + $0x10] sm:$0xf]
    %v993 = vld [vmem:[#allocation3 + $0x14] sm:$0xf]
    %v994 = vld [vmem:[#allocation3 + $0x18] sm:$0xf]
    %v995 = vld [vmem:[#allocation3 + $0x1c] sm:$0xf]
    %v996 = vld [vmem:[#allocation17] sm:$0xff]
    %v997 = vld [vmem:[#allocation17 + $0x8] sm:$0xff]
    %v998 = vld [vmem:[#allocation17 + $0x10] sm:$0xff]
    %v999 = vld [vmem:[#allocation17 + $0x18] sm:$0xff]
    %v1000 = vld [vmem:[#allocation17 + $0x20] sm:$0xff]
    %v1001 = vld [vmem:[#allocation17 + $0x28] sm:$0xff]
    %v1002 = vld [vmem:[#allocation17 + $0x30] sm:$0xff]
    %v1003 = vld [vmem:[#allocation17 + $0x38] sm:$0xff]
    %v1004 = vld [vmem:[#allocation17 + $0x40] sm:$0xff]
    %v1005 = vld [vmem:[#allocation17 + $0x48] sm:$0xff]
    %v1006 = vld [vmem:[#allocation17 + $0x50] sm:$0xff]
    %v1007 = vld [vmem:[#allocation17 + $0x58] sm:$0xff]
    %v1008 = vld [vmem:[#allocation17 + $0x60] sm:$0xff]
    %v1009 = vld [vmem:[#allocation17 + $0x68] sm:$0xff]
    %v1010 = vld [vmem:[#allocation17 + $0x70] sm:$0xff]
    %v1011 = vld [vmem:[#allocation17 + $0x78] sm:$0xff]
    %v1012 = vld [vmem:[#allocation17 + $0x80] sm:$0xff]
    %v1013 = vld [vmem:[#allocation17 + $0x88] sm:$0xff]
    %v1014 = vld [vmem:[#allocation17 + $0x90] sm:$0xff]
    %v1015 = vld [vmem:[#allocation17 + $0x98] sm:$0xff]
    %v1016 = vld [vmem:[#allocation17 + $0xa0] sm:$0xff]
    %v1017 = vld [vmem:[#allocation17 + $0xa8] sm:$0xff]
    %v1018 = vld [vmem:[#allocation17 + $0xb0] sm:$0xff]
    %v1019 = vld [vmem:[#allocation17 + $0xb8] sm:$0xff]
    %v1020 = vld [vmem:[#allocation17 + $0xc0] sm:$0xff]
    %v1021 = vld [vmem:[#allocation17 + $0xc8] sm:$0xff]
    %v1022 = vld [vmem:[#allocation17 + $0xd0] sm:$0xff]
    %v1023 = vld [vmem:[#allocation17 + $0xd8] sm:$0xff]
    %v1024 = vld [vmem:[#allocation17 + $0xe0] sm:$0xff]
    %v1025 = vld [vmem:[#allocation17 + $0xe8] sm:$0xff]
    %v1026 = vld [vmem:[#allocation17 + $0xf0] sm:$0xff]
    %v1027 = vld [vmem:[#allocation17 + $0xf8] sm:$0xff]
    %v1028 = vld [vmem:[%s6] sm:$0x1]
    %v1030 = vperm.slane %v1028, 0
    %1040 = vst [vmem:[#allocation1] ss:$4 sm:$0xff] %v988
    %s1041 = scalar_lea.vmem [#allocation1], 1
    %1042 = vst [vmem:[%s1041] ss:$4 sm:$0xff] %v989
    %s1043 = scalar_lea.vmem [#allocation1], 2
    %1044 = vst [vmem:[%s1043] ss:$4 sm:$0xff] %v990
    %s1045 = scalar_lea.vmem [#allocation1], 3
    %1046 = vst [vmem:[%s1045] ss:$4 sm:$0xff] %v991
    %s1047 = scalar_lea.vmem [#allocation1], 32
    %1048 = vst [vmem:[%s1047] ss:$4 sm:$0xff] %v992
    %s1049 = scalar_lea.vmem [#allocation1], 33
    %1050 = vst [vmem:[%s1049] ss:$4 sm:$0xff] %v993
    %s1051 = scalar_lea.vmem [#allocation1], 34
    %1052 = vst [vmem:[%s1051] ss:$4 sm:$0xff] %v994
    %s1053 = scalar_lea.vmem [#allocation1], 35
    %1054 = vst [vmem:[%s1053] ss:$4 sm:$0xff] %v995
    %v1055 = vld.sshfl [vmem:[#allocation1] sm:$0xff pattern:$0x73625140]
    %v1056 = vld.sshfl [vmem:[#allocation1 + $0x8] sm:$0xff pattern:$0x73625140]
    %v1057 = vld.sshfl [vmem:[#allocation1 + $0x20] sm:$0xff pattern:$0x73625140]
    %v1058 = vld.sshfl [vmem:[#allocation1 + $0x28] sm:$0xff pattern:$0x73625140]
    %1063 = vmatpush.msra.mxu0 %v1011
    %1064 = vmatpush.msra.mxu0 %v1010
    %1065 = vmatpush.msra.mxu0 %v1009
    %1066 = vmatpush.msra.mxu0 %v1008
    %1067 = vmatpush.msra.mxu0 %v1007
    %1068 = vmatpush.msra.mxu0 %v1006
    %1069 = vmatpush.msra.mxu0 %v1005
    %1070 = vmatpush.msra.mxu0 %v1004
    %1071 = vmatpush.msra.mxu0 %v1003
    %1072 = vmatpush.msra.mxu0 %v1002
    %1073 = vmatpush.msra.mxu0 %v1001
    %1074 = vmatpush.msra.mxu0 %v1000
    %1075 = vmatpush.msra.mxu0 %v999
    %1076 = vmatpush.msra.mxu0 %v998
    %1077 = vmatpush.msra.mxu0 %v997
    %1078 = vmatpush.msra.mxu0 %v996
    %1079 = vmatmul.f32.gmra.mxu0 %v1055
    %v1080 = vpop.f32.mrf.mxu0
    %v1081 = vadd.f32 %v1030, %v1080
    %1082 = vmatmul.f32.gmra.mxu0 %v1057
    %v1083 = vpop.f32.mrf.mxu0
    %v1084 = vadd.f32 %v1030, %v1083
    %1085 = vdwg.mxu0
    %1086 = vmatpush.msra.mxu0 %v1027
    %1087 = vmatpush.msra.mxu0 %v1026
    %1088 = vmatpush.msra.mxu0 %v1025
    %1089 = vmatpush.msra.mxu0 %v1024
    %1090 = vmatpush.msra.mxu0 %v1023
    %1091 = vmatpush.msra.mxu0 %v1022
    %1092 = vmatpush.msra.mxu0 %v1021
    %1093 = vmatpush.msra.mxu0 %v1020
    %1094 = vmatpush.msra.mxu0 %v1019
    %1095 = vmatpush.msra.mxu0 %v1018
    %1096 = vmatpush.msra.mxu0 %v1017
    %1097 = vmatpush.msra.mxu0 %v1016
    %1098 = vmatpush.msra.mxu0 %v1015
    %1099 = vmatpush.msra.mxu0 %v1014
    %1100 = vmatpush.msra.mxu0 %v1013
    %1101 = vmatpush.msra.mxu0 %v1012
    %1102 = vmatmul.f32.gmra.mxu0 %v1056
    %v1103 = vpop.f32.mrf.mxu0
    %v1104 = vadd.f32 %v1081, %v1103
    %1105 = vmatmul.f32.gmra.mxu0 %v1058
    %v1106 = vpop.f32.mrf.mxu0
    %v1107 = vadd.f32 %v1084, %v1106
    %1108 = vdwg.mxu0
    %v1111 = vrot.slane %v1104, 2
    %v1112 = vrot.slane %v1104, 4
    %v1113 = vrot.slane %v1104, 6
    %v1114 = vrot.slane %v1107, 2
    %v1115 = vrot.slane %v1107, 4
    %v1116 = vrot.slane %v1107, 6
    %1123 = vst [vmem:[#allocation19] sm:$0x3] %v1104
    %1124 = vst [vmem:[#allocation19 + $0x2] sm:$0x3] %v1111
    %1125 = vst [vmem:[#allocation19 + $0x4] sm:$0x3] %v1112
    %1126 = vst [vmem:[#allocation19 + $0x6] sm:$0x3] %v1113
    %1127 = vst [vmem:[#allocation19 + $0x8] sm:$0x3] %v1107
    %1128 = vst [vmem:[#allocation19 + $0xa] sm:$0x3] %v1114
    %1129 = vst [vmem:[#allocation19 + $0xc] sm:$0x3] %v1115
    %1130 = vst [vmem:[#allocation19 + $0xe] sm:$0x3] %v1116
    // Predicated region
    $region61: #{tpu_custom_call.1} parent=1 // pred_check
      _
    $region62: #{tpu_custom_call.1} parent=1 // pred_check_branch
      %1132 = sbr.rel (0) target = $region64
    $region63: #{tpu_custom_call.1} parent=1 // pred_region
      %1134 = vsyncadd [#allocation10], 0
      %s1135 = sshll.u32 [#allocation19], 4
      %s1136 = int_to_ptr.vmem [resolvable:$true] %s1135
      %s1137 = sshll.u32 %s7, 4
      %s1138 = int_to_ptr.hbm [resolvable:$true] %s1137
      %1143 = dma.vmem_to_hbm [thread:$0]  %s1136, 256, %s1138, [#allocation10], 32, 32, 2
    $region64: #{tpu_custom_call.1} parent=1 // pred_fallthru
      _
    // Predicated region
    $region65: #{tpu_custom_call.1} parent=1 // pred_check
      _
    $region66: #{tpu_custom_call.1} parent=1 // pred_check_branch
      %1145 = sbr.rel (0) target = $region68
    $region67: #{tpu_custom_call.1} parent=1 // pred_region
      %1147 = dma.done [#allocation10], 256
    $region68: #{tpu_custom_call.1} parent=1 // pred_fallthru
      _
    %1148 = vsyncpa [#allocation9], 1
    %1149 = vsyncpa [#allocation12], 1
    %1150 = vsyncpa [#allocation15], 1
    %1151 = vsyncpa [#allocation18], 1
    %1152 = vsyncpa [#allocation10], 1

</llo_original>
